<compile_context>
chip_gen: v7x
topology: tpu7x:2x2x1
jax: 0.10.0
libtpu: 0.0.40
codegen_flags: <defaults>
</compile_context>

<pallas_src>
import jax
import jax.numpy as jnp
from jax.experimental import pallas as pl
from jax.experimental.pallas import tpu as pltpu


def _encoder_lstm_kernel(tok_ref,              # SMEM scalar-prefetch: (T,) int32
                         emb_ref,              # (V, H)    VMEM-resident
                         h0_ref, c0_ref,       # (1, H)
                         w_ih_ref, w_hh_ref,   # (H, 4H) each, VMEM-resident
                         b_ref,                # (1, 4H) combined bias
                         hseq_ref,             # out: (T, 1, H) per-step h
                         hn_ref, cn_ref):      # out: (1, H) final h / c
    H = h0_ref.shape[-1]
    T = hseq_ref.shape[0]

    # Hoist resident operands out of the unrolled loop (loaded once into vregs).
    w_ih = w_ih_ref[...]
    w_hh = w_hh_ref[...]
    bias = b_ref[...]

    # Loop-carried state lives in vregs, not VMEM scratch.
    h = h0_ref[...].astype(jnp.float32)        # (1, H)
    c = c0_ref[...].astype(jnp.float32)        # (1, H)

    # T is static and small: fully unrolled recurrence inside one kernel call.
    for t in range(T):
        tok = tok_ref[t]
        # Fused embedding lookup: dynamic sublane gather from the resident table.
        # TODO(synk): no runtime bounds check on `tok` (VMEM refs are unchecked);
        # out-of-range ids would silently read adjacent VMEM, as in any gather.
        x = emb_ref[pl.ds(tok, 1), :].astype(jnp.float32)          # (1, H)

        gates = (jnp.dot(x, w_ih, preferred_element_type=jnp.float32)
                 + jnp.dot(h, w_hh, preferred_element_type=jnp.float32)
                 + bias)                                           # (1, 4H)

        # Two full-vreg transcendental passes, then lane-slice the gate groups.
        sg = jax.nn.sigmoid(gates)
        th = jnp.tanh(gates)
        i_g = sg[:, 0 * H:1 * H]
        f_g = sg[:, 1 * H:2 * H]
        g_g = th[:, 2 * H:3 * H]
        o_g = sg[:, 3 * H:4 * H]

        c = f_g * c + i_g * g_g
        h = o_g * jnp.tanh(c)

        # Store into the VMEM-resident output slab; HBM writeback happens once.
        hseq_ref[t] = h

    hn_ref[...] = h
    cn_ref[...] = c


def lstm_encode_pallas(tokens, h0, c0, emb, w_ih_t, w_hh_t, bias):
    """Run the full LSTM encoder over `tokens` in one fused kernel.

    tokens: (T,) int32; h0,c0: (1,H); emb: (V,H); w_ih_t,w_hh_t: (H,4H); bias: (1,4H).
    Returns (h_seq (T,1,H), h_n (1,H), c_n (1,H)) in float32.
    """
    T = int(tokens.shape[0])
    V, H = emb.shape

    grid_spec = pltpu.PrefetchScalarGridSpec(
        num_scalar_prefetch=1,
        grid=(1,),                               # single step: recurrence is in-kernel
        in_specs=[
            # Full-array blocks, constant index maps -> DMA'd once, VMEM-resident.
            pl.BlockSpec((V, H), lambda i, ids: (0, 0)),          # embedding table
            pl.BlockSpec((1, H), lambda i, ids: (0, 0)),          # h0
            pl.BlockSpec((1, H), lambda i, ids: (0, 0)),          # c0
            pl.BlockSpec((H, 4 * H), lambda i, ids: (0, 0)),      # W_ih^T
            pl.BlockSpec((H, 4 * H), lambda i, ids: (0, 0)),      # W_hh^T
            pl.BlockSpec((1, 4 * H), lambda i, ids: (0, 0)),      # combined bias
        ],
        out_specs=[
            pl.BlockSpec((T, 1, H), lambda i, ids: (0, 0, 0)),    # per-step h
            pl.BlockSpec((1, H), lambda i, ids: (0, 0)),          # final h
            pl.BlockSpec((1, H), lambda i, ids: (0, 0)),          # final c
        ],
    )
    return pl.pallas_call(
        _encoder_lstm_kernel,
        out_shape=(jax.ShapeDtypeStruct((T, 1, H), jnp.float32),
                   jax.ShapeDtypeStruct((1, H), jnp.float32),
                   jax.ShapeDtypeStruct((1, H), jnp.float32)),
        grid_spec=grid_spec,
        compiler_params=pltpu.CompilerParams(
            dimension_semantics=("arbitrary",)),
    )(tokens, emb, h0, c0, w_ih_t, w_hh_t, bias)


class EncoderRNNPallas:
    """JAX/Pallas port of the (unidirectional, num_layers=1) EncoderRNN."""
    # TODO(synk): bidirectional / num_layers>1 branches are driven by argparse
    # flags in the original script; only the default unidirectional path is
    # implemented here.
    # TODO(synk): the embedding table is VMEM-resident (fine for this small
    # vocab); a large vocabulary would need a pl.Element row-gather or manual
    # DMA gather, especially on v7x (64 MiB VMEM).
    # TODO(synk): the module's forward uses .view(1,1,-1), i.e. batch=1; a
    # batched (B,2H)x(2H,4H) variant would be needed for real MXU throughput.

    def __init__(self, hidden_size, input_size, batch_size, key):
        self.hidden_size = hidden_size
        self.num_layers = 1
        k_emb, k_wih, k_whh, k_bih, k_bhh = jax.random.split(key, 5)
        H = hidden_size
        bound = 1.0 / jnp.sqrt(H)
        # nn.Embedding(input_size, H): weight (input_size, H), N(0,1) init.
        self.embedding = jax.random.normal(k_emb, (input_size, H), jnp.float32)
        # nn.LSTM(H, H, 1): weight_ih_l0 (4H,H), weight_hh_l0 (4H,H), biases (4H,)
        w_ih = jax.random.uniform(k_wih, (4 * H, H), jnp.float32, -bound, bound)
        w_hh = jax.random.uniform(k_whh, (4 * H, H), jnp.float32, -bound, bound)
        b_ih = jax.random.uniform(k_bih, (4 * H,), jnp.float32, -bound, bound)
        b_hh = jax.random.uniform(k_bhh, (4 * H,), jnp.float32, -bound, bound)
        # Pre-transpose weights for the kernel (glue, not hot path).
        self.w_ih_t = jnp.transpose(w_ih)                    # (H, 4H)
        self.w_hh_t = jnp.transpose(w_hh)                    # (H, 4H)
        self.bias = (b_ih + b_hh).reshape(1, 4 * H)          # (1, 4H)

    def initHidden(self):
        H = self.hidden_size
        return [jnp.zeros((self.num_layers, 1, H), jnp.float32),
                jnp.zeros((self.num_layers, 1, H), jnp.float32)]

    def encode_sequence(self, tokens, hidden):
        """Fused multi-step encode. tokens: (T,) int32; hidden: [h0, c0] (1,1,H)."""
        H = self.hidden_size
        h0, c0 = hidden
        h_seq, h_n, c_n = lstm_encode_pallas(
            tokens.astype(jnp.int32), h0.reshape(1, H), c0.reshape(1, H),
            self.embedding, self.w_ih_t, self.w_hh_t, self.bias)
        return h_seq, (h_n.reshape(1, 1, H), c_n.reshape(1, 1, H))

    def __call__(self, token, hidden):
        """Single-step forward (original module semantics).

        token: scalar int32 index. hidden: [h0, c0] each (1,1,H).
        Returns (output (1,1,H), (h_n (1,1,H), c_n (1,1,H))).
        """
        tokens = jnp.asarray(token, jnp.int32).reshape(1)
        outputs, (h_n, c_n) = self.encode_sequence(tokens, hidden)
        return outputs.reshape(1, 1, self.hidden_size), (h_n, c_n)


def _reference_lstm_step(x, h, c, w_ih_t, w_hh_t, bias):
    H = h.shape[-1]
    gates = x @ w_ih_t + h @ w_hh_t + bias
    i = jax.nn.sigmoid(gates[:, 0 * H:1 * H])
    f = jax.nn.sigmoid(gates[:, 1 * H:2 * H])
    g = jnp.tanh(gates[:, 2 * H:3 * H])
    o = jax.nn.sigmoid(gates[:, 3 * H:4 * H])
    c_new = f * c + i * g
    return o * jnp.tanh(c_new), c_new


if __name__ == "__main__":
    hidden_size = 32
    input_size = 64      # vocabulary size
    batch_size = 1       # module's forward uses .view(1,1,-1): single sequence
    seq_len = 8

    key = jax.random.PRNGKey(0)
    enc = EncoderRNNPallas(hidden_size, input_size, batch_size, key)

    tokens = jax.random.randint(jax.random.PRNGKey(1), (seq_len,), 0, input_size,
                                dtype=jnp.int32)
    hidden = enc.initHidden()

    # Fused sequence encode: one pallas_call, recurrence fully inside the kernel.
    outputs, (h_n, c_n) = enc.encode_sequence(tokens, hidden)
    jax.block_until_ready((outputs, h_n, c_n))

    # Single-step forward preserving the original module signature.
    out1, (h1, c1) = enc(tokens[0], hidden)
    jax.block_until_ready((out1, h1, c1))

    # Pure-JAX reference: step the LSTM cell token by token.
    h_ref = hidden[0].reshape(1, hidden_size)
    c_ref = hidden[1].reshape(1, hidden_size)
    hs_ref = []
    cs_ref = []
    for t in range(seq_len):
        x = enc.embedding[tokens[t]].reshape(1, hidden_size)
        h_ref, c_ref = _reference_lstm_step(x, h_ref, c_ref,
                                            enc.w_ih_t, enc.w_hh_t, enc.bias)
        hs_ref.append(h_ref)
        cs_ref.append(c_ref)
    hs_ref = jnp.stack(hs_ref)                   # (T, 1, H)

    assert outputs.shape == (seq_len, 1, hidden_size)
    assert h_n.shape == (1, 1, hidden_size)
    assert c_n.shape == (1, 1, hidden_size)
    assert jnp.allclose(outputs, hs_ref, atol=2e-5)
    assert jnp.allclose(h_n.reshape(1, -1), h_ref, atol=2e-5)
    assert jnp.allclose(c_n.reshape(1, -1), c_ref, atol=2e-5)
    # Single-step forward must match the first reference step (h and c).
    assert out1.shape == (1, 1, hidden_size)
    assert jnp.allclose(out1.reshape(1, -1), hs_ref[0], atol=2e-5)
    assert jnp.allclose(h1.reshape(1, -1), hs_ref[0], atol=2e-5)
    assert jnp.allclose(c1.reshape(1, -1), cs_ref[0], atol=2e-5)
    print("KERNEL_OK")
</pallas_src>

<mosaic_0001>
module attributes {stable_mosaic.version = 11 : i64} {
  func.func @_encoder_lstm_kernel(%arg0: i32, %arg1: memref<8xi32, #tpu.memory_space<smem>>, %arg2: memref<64x32xf32, #tpu.memory_space<vmem>>, %arg3: memref<1x32xf32, #tpu.memory_space<vmem>>, %arg4: memref<1x32xf32, #tpu.memory_space<vmem>>, %arg5: memref<32x128xf32, #tpu.memory_space<vmem>>, %arg6: memref<32x128xf32, #tpu.memory_space<vmem>>, %arg7: memref<1x128xf32, #tpu.memory_space<vmem>>, %arg8: memref<8x1x32xf32, #tpu.memory_space<vmem>>, %arg9: memref<1x32xf32, #tpu.memory_space<vmem>>, %arg10: memref<1x32xf32, #tpu.memory_space<vmem>>) attributes {dimension_semantics = [#tpu.dimension_semantics<arbitrary>], iteration_bounds = array<i64: 1>, scalar_prefetch = 1 : i64, scratch_operands = 0 : i64, tpu.core_type = #tpu.core_type<tc>, window_params = [{pipeline_mode = #tpu.pipeline_mode<synchronous>, transform_indices = @transform_0, window_bounds = array<i64: 64, 32>}, {pipeline_mode = #tpu.pipeline_mode<synchronous>, transform_indices = @transform_1, window_bounds = array<i64: 1, 32>}, {pipeline_mode = #tpu.pipeline_mode<synchronous>, transform_indices = @transform_2, window_bounds = array<i64: 1, 32>}, {pipeline_mode = #tpu.pipeline_mode<synchronous>, transform_indices = @transform_3, window_bounds = array<i64: 32, 128>}, {pipeline_mode = #tpu.pipeline_mode<synchronous>, transform_indices = @transform_4, window_bounds = array<i64: 32, 128>}, {pipeline_mode = #tpu.pipeline_mode<synchronous>, transform_indices = @transform_5, window_bounds = array<i64: 1, 128>}, {pipeline_mode = #tpu.pipeline_mode<synchronous>, transform_indices = @transform_6, window_bounds = array<i64: 8, 1, 32>}, {pipeline_mode = #tpu.pipeline_mode<synchronous>, transform_indices = @transform_7, window_bounds = array<i64: 1, 32>}, {pipeline_mode = #tpu.pipeline_mode<synchronous>, transform_indices = @transform_8, window_bounds = array<i64: 1, 32>}]} {
    %c0 = arith.constant 0 : index
    %c0_0 = arith.constant 0 : index
    %0 = vector.load %arg5[%c0, %c0_0] : memref<32x128xf32, #tpu.memory_space<vmem>>, vector<32x128xf32>
    %c0_1 = arith.constant 0 : index
    %c0_2 = arith.constant 0 : index
    %1 = vector.load %arg6[%c0_1, %c0_2] : memref<32x128xf32, #tpu.memory_space<vmem>>, vector<32x128xf32>
    %c0_3 = arith.constant 0 : index
    %c0_4 = arith.constant 0 : index
    %2 = vector.load %arg7[%c0_3, %c0_4] : memref<1x128xf32, #tpu.memory_space<vmem>>, vector<1x128xf32>
    %c0_5 = arith.constant 0 : index
    %c0_6 = arith.constant 0 : index
    %3 = vector.load %arg3[%c0_5, %c0_6] : memref<1x32xf32, #tpu.memory_space<vmem>>, vector<1x32xf32>
    %c0_7 = arith.constant 0 : index
    %c0_8 = arith.constant 0 : index
    %4 = vector.load %arg4[%c0_7, %c0_8] : memref<1x32xf32, #tpu.memory_space<vmem>>, vector<1x32xf32>
    %c0_9 = arith.constant 0 : index
    %5 = memref.load %arg1[%c0_9] : memref<8xi32, #tpu.memory_space<smem>>
    %6 = arith.index_cast %5 : i32 to index
    %c0_10 = arith.constant 0 : index
    %7 = vector.load %arg2[%6, %c0_10] : memref<64x32xf32, #tpu.memory_space<vmem>>, vector<1x32xf32>
    %cst = arith.constant dense<0.000000e+00> : vector<1x128xf32>
    %8 = tpu.matmul %7, %0, %cst {dimension_numbers = #tpu.dot_dimension_numbers<[1], [0], [0], [1], [0, 0, 1, 1], [], []>} : vector<1x32xf32>, vector<32x128xf32>, vector<1x128xf32> -> vector<1x128xf32>
    %cst_11 = arith.constant dense<0.000000e+00> : vector<1x128xf32>
    %9 = tpu.matmul %3, %1, %cst_11 {dimension_numbers = #tpu.dot_dimension_numbers<[1], [0], [0], [1], [0, 0, 1, 1], [], []>} : vector<1x32xf32>, vector<32x128xf32>, vector<1x128xf32> -> vector<1x128xf32>
    %10 = arith.addf %8, %9 : vector<1x128xf32>
    %11 = arith.addf %10, %2 : vector<1x128xf32>
    %12 = arith.negf %11 : vector<1x128xf32>
    %13 = math.exp %12 : vector<1x128xf32>
    %cst_12 = arith.constant 1.000000e+00 : f32
    %14 = vector.broadcast %cst_12 : f32 to vector<1x128xf32>
    %15 = arith.addf %14, %13 : vector<1x128xf32>
    %16 = arith.divf %14, %15 : vector<1x128xf32>
    %17 = math.tanh %11 : vector<1x128xf32>
    %18 = vector.extract_strided_slice %16 {offsets = [0, 0], sizes = [1, 32], strides = [1, 1]} : vector<1x128xf32> to vector<1x32xf32>
    %19 = vector.extract_strided_slice %16 {offsets = [0, 32], sizes = [1, 32], strides = [1, 1]} : vector<1x128xf32> to vector<1x32xf32>
    %20 = vector.extract_strided_slice %17 {offsets = [0, 64], sizes = [1, 32], strides = [1, 1]} : vector<1x128xf32> to vector<1x32xf32>
    %21 = vector.extract_strided_slice %16 {offsets = [0, 96], sizes = [1, 32], strides = [1, 1]} : vector<1x128xf32> to vector<1x32xf32>
    %22 = arith.mulf %19, %4 : vector<1x32xf32>
    %23 = arith.mulf %18, %20 : vector<1x32xf32>
    %24 = arith.addf %22, %23 : vector<1x32xf32>
    %25 = math.tanh %24 : vector<1x32xf32>
    %26 = arith.mulf %21, %25 : vector<1x32xf32>
    %c0_13 = arith.constant 0 : index
    %c0_14 = arith.constant 0 : index
    %c0_15 = arith.constant 0 : index
    %27 = vector.load %arg8[%c0_13, %c0_14, %c0_15] : memref<8x1x32xf32, #tpu.memory_space<vmem>>, vector<1x1x32xf32>
    %28 = vector.shape_cast %27 : vector<1x1x32xf32> to vector<1x32xf32>
    %29 = vector.shape_cast %26 : vector<1x32xf32> to vector<1x1x32xf32>
    tpu.vector_store %arg8[%c0_13, %c0_14, %c0_15], %29 {strides = array<i32>} : memref<8x1x32xf32, #tpu.memory_space<vmem>>, vector<1x1x32xf32>,
    %c1 = arith.constant 1 : index
    %30 = memref.load %arg1[%c1] : memref<8xi32, #tpu.memory_space<smem>>
    %31 = arith.index_cast %30 : i32 to index
    %c0_16 = arith.constant 0 : index
    %32 = vector.load %arg2[%31, %c0_16] : memref<64x32xf32, #tpu.memory_space<vmem>>, vector<1x32xf32>
    %cst_17 = arith.constant dense<0.000000e+00> : vector<1x128xf32>
    %33 = tpu.matmul %32, %0, %cst_17 {dimension_numbers = #tpu.dot_dimension_numbers<[1], [0], [0], [1], [0, 0, 1, 1], [], []>} : vector<1x32xf32>, vector<32x128xf32>, vector<1x128xf32> -> vector<1x128xf32>
    %cst_18 = arith.constant dense<0.000000e+00> : vector<1x128xf32>
    %34 = tpu.matmul %26, %1, %cst_18 {dimension_numbers = #tpu.dot_dimension_numbers<[1], [0], [0], [1], [0, 0, 1, 1], [], []>} : vector<1x32xf32>, vector<32x128xf32>, vector<1x128xf32> -> vector<1x128xf32>
    %35 = arith.addf %33, %34 : vector<1x128xf32>
    %36 = arith.addf %35, %2 : vector<1x128xf32>
    %37 = arith.negf %36 : vector<1x128xf32>
    %38 = math.exp %37 : vector<1x128xf32>
    %cst_19 = arith.constant 1.000000e+00 : f32
    %39 = vector.broadcast %cst_19 : f32 to vector<1x128xf32>
    %40 = arith.addf %39, %38 : vector<1x128xf32>
    %41 = arith.divf %39, %40 : vector<1x128xf32>
    %42 = math.tanh %36 : vector<1x128xf32>
    %43 = vector.extract_strided_slice %41 {offsets = [0, 0], sizes = [1, 32], strides = [1, 1]} : vector<1x128xf32> to vector<1x32xf32>
    %44 = vector.extract_strided_slice %41 {offsets = [0, 32], sizes = [1, 32], strides = [1, 1]} : vector<1x128xf32> to vector<1x32xf32>
    %45 = vector.extract_strided_slice %42 {offsets = [0, 64], sizes = [1, 32], strides = [1, 1]} : vector<1x128xf32> to vector<1x32xf32>
    %46 = vector.extract_strided_slice %41 {offsets = [0, 96], sizes = [1, 32], strides = [1, 1]} : vector<1x128xf32> to vector<1x32xf32>
    %47 = arith.mulf %44, %24 : vector<1x32xf32>
    %48 = arith.mulf %43, %45 : vector<1x32xf32>
    %49 = arith.addf %47, %48 : vector<1x32xf32>
    %50 = math.tanh %49 : vector<1x32xf32>
    %51 = arith.mulf %46, %50 : vector<1x32xf32>
    %c1_20 = arith.constant 1 : index
    %c0_21 = arith.constant 0 : index
    %c0_22 = arith.constant 0 : index
    %52 = vector.load %arg8[%c1_20, %c0_21, %c0_22] : memref<8x1x32xf32, #tpu.memory_space<vmem>>, vector<1x1x32xf32>
    %53 = vector.shape_cast %52 : vector<1x1x32xf32> to vector<1x32xf32>
    %54 = vector.shape_cast %51 : vector<1x32xf32> to vector<1x1x32xf32>
    tpu.vector_store %arg8[%c1_20, %c0_21, %c0_22], %54 {strides = array<i32>} : memref<8x1x32xf32, #tpu.memory_space<vmem>>, vector<1x1x32xf32>,
    %c2 = arith.constant 2 : index
    %55 = memref.load %arg1[%c2] : memref<8xi32, #tpu.memory_space<smem>>
    %56 = arith.index_cast %55 : i32 to index
    %c0_23 = arith.constant 0 : index
    %57 = vector.load %arg2[%56, %c0_23] : memref<64x32xf32, #tpu.memory_space<vmem>>, vector<1x32xf32>
    %cst_24 = arith.constant dense<0.000000e+00> : vector<1x128xf32>
    %58 = tpu.matmul %57, %0, %cst_24 {dimension_numbers = #tpu.dot_dimension_numbers<[1], [0], [0], [1], [0, 0, 1, 1], [], []>} : vector<1x32xf32>, vector<32x128xf32>, vector<1x128xf32> -> vector<1x128xf32>
    %cst_25 = arith.constant dense<0.000000e+00> : vector<1x128xf32>
    %59 = tpu.matmul %51, %1, %cst_25 {dimension_numbers = #tpu.dot_dimension_numbers<[1], [0], [0], [1], [0, 0, 1, 1], [], []>} : vector<1x32xf32>, vector<32x128xf32>, vector<1x128xf32> -> vector<1x128xf32>
    %60 = arith.addf %58, %59 : vector<1x128xf32>
    %61 = arith.addf %60, %2 : vector<1x128xf32>
    %62 = arith.negf %61 : vector<1x128xf32>
    %63 = math.exp %62 : vector<1x128xf32>
    %cst_26 = arith.constant 1.000000e+00 : f32
    %64 = vector.broadcast %cst_26 : f32 to vector<1x128xf32>
    %65 = arith.addf %64, %63 : vector<1x128xf32>
    %66 = arith.divf %64, %65 : vector<1x128xf32>
    %67 = math.tanh %61 : vector<1x128xf32>
    %68 = vector.extract_strided_slice %66 {offsets = [0, 0], sizes = [1, 32], strides = [1, 1]} : vector<1x128xf32> to vector<1x32xf32>
    %69 = vector.extract_strided_slice %66 {offsets = [0, 32], sizes = [1, 32], strides = [1, 1]} : vector<1x128xf32> to vector<1x32xf32>
    %70 = vector.extract_strided_slice %67 {offsets = [0, 64], sizes = [1, 32], strides = [1, 1]} : vector<1x128xf32> to vector<1x32xf32>
    %71 = vector.extract_strided_slice %66 {offsets = [0, 96], sizes = [1, 32], strides = [1, 1]} : vector<1x128xf32> to vector<1x32xf32>
    %72 = arith.mulf %69, %49 : vector<1x32xf32>
    %73 = arith.mulf %68, %70 : vector<1x32xf32>
    %74 = arith.addf %72, %73 : vector<1x32xf32>
    %75 = math.tanh %74 : vector<1x32xf32>
    %76 = arith.mulf %71, %75 : vector<1x32xf32>
    %c2_27 = arith.constant 2 : index
    %c0_28 = arith.constant 0 : index
    %c0_29 = arith.constant 0 : index
    %77 = vector.load %arg8[%c2_27, %c0_28, %c0_29] : memref<8x1x32xf32, #tpu.memory_space<vmem>>, vector<1x1x32xf32>
    %78 = vector.shape_cast %77 : vector<1x1x32xf32> to vector<1x32xf32>
    %79 = vector.shape_cast %76 : vector<1x32xf32> to vector<1x1x32xf32>
    tpu.vector_store %arg8[%c2_27, %c0_28, %c0_29], %79 {strides = array<i32>} : memref<8x1x32xf32, #tpu.memory_space<vmem>>, vector<1x1x32xf32>,
    %c3 = arith.constant 3 : index
    %80 = memref.load %arg1[%c3] : memref<8xi32, #tpu.memory_space<smem>>
    %81 = arith.index_cast %80 : i32 to index
    %c0_30 = arith.constant 0 : index
    %82 = vector.load %arg2[%81, %c0_30] : memref<64x32xf32, #tpu.memory_space<vmem>>, vector<1x32xf32>
    %cst_31 = arith.constant dense<0.000000e+00> : vector<1x128xf32>
    %83 = tpu.matmul %82, %0, %cst_31 {dimension_numbers = #tpu.dot_dimension_numbers<[1], [0], [0], [1], [0, 0, 1, 1], [], []>} : vector<1x32xf32>, vector<32x128xf32>, vector<1x128xf32> -> vector<1x128xf32>
    %cst_32 = arith.constant dense<0.000000e+00> : vector<1x128xf32>
    %84 = tpu.matmul %76, %1, %cst_32 {dimension_numbers = #tpu.dot_dimension_numbers<[1], [0], [0], [1], [0, 0, 1, 1], [], []>} : vector<1x32xf32>, vector<32x128xf32>, vector<1x128xf32> -> vector<1x128xf32>
    %85 = arith.addf %83, %84 : vector<1x128xf32>
    %86 = arith.addf %85, %2 : vector<1x128xf32>
    %87 = arith.negf %86 : vector<1x128xf32>
    %88 = math.exp %87 : vector<1x128xf32>
    %cst_33 = arith.constant 1.000000e+00 : f32
    %89 = vector.broadcast %cst_33 : f32 to vector<1x128xf32>
    %90 = arith.addf %89, %88 : vector<1x128xf32>
    %91 = arith.divf %89, %90 : vector<1x128xf32>
    %92 = math.tanh %86 : vector<1x128xf32>
    %93 = vector.extract_strided_slice %91 {offsets = [0, 0], sizes = [1, 32], strides = [1, 1]} : vector<1x128xf32> to vector<1x32xf32>
    %94 = vector.extract_strided_slice %91 {offsets = [0, 32], sizes = [1, 32], strides = [1, 1]} : vector<1x128xf32> to vector<1x32xf32>
    %95 = vector.extract_strided_slice %92 {offsets = [0, 64], sizes = [1, 32], strides = [1, 1]} : vector<1x128xf32> to vector<1x32xf32>
    %96 = vector.extract_strided_slice %91 {offsets = [0, 96], sizes = [1, 32], strides = [1, 1]} : vector<1x128xf32> to vector<1x32xf32>
    %97 = arith.mulf %94, %74 : vector<1x32xf32>
    %98 = arith.mulf %93, %95 : vector<1x32xf32>
    %99 = arith.addf %97, %98 : vector<1x32xf32>
    %100 = math.tanh %99 : vector<1x32xf32>
    %101 = arith.mulf %96, %100 : vector<1x32xf32>
    %c3_34 = arith.constant 3 : index
    %c0_35 = arith.constant 0 : index
    %c0_36 = arith.constant 0 : index
    %102 = vector.load %arg8[%c3_34, %c0_35, %c0_36] : memref<8x1x32xf32, #tpu.memory_space<vmem>>, vector<1x1x32xf32>
    %103 = vector.shape_cast %102 : vector<1x1x32xf32> to vector<1x32xf32>
    %104 = vector.shape_cast %101 : vector<1x32xf32> to vector<1x1x32xf32>
    tpu.vector_store %arg8[%c3_34, %c0_35, %c0_36], %104 {strides = array<i32>} : memref<8x1x32xf32, #tpu.memory_space<vmem>>, vector<1x1x32xf32>,
    %c4 = arith.constant 4 : index
    %105 = memref.load %arg1[%c4] : memref<8xi32, #tpu.memory_space<smem>>
    %106 = arith.index_cast %105 : i32 to index
    %c0_37 = arith.constant 0 : index
    %107 = vector.load %arg2[%106, %c0_37] : memref<64x32xf32, #tpu.memory_space<vmem>>, vector<1x32xf32>
    %cst_38 = arith.constant dense<0.000000e+00> : vector<1x128xf32>
    %108 = tpu.matmul %107, %0, %cst_38 {dimension_numbers = #tpu.dot_dimension_numbers<[1], [0], [0], [1], [0, 0, 1, 1], [], []>} : vector<1x32xf32>, vector<32x128xf32>, vector<1x128xf32> -> vector<1x128xf32>
    %cst_39 = arith.constant dense<0.000000e+00> : vector<1x128xf32>
    %109 = tpu.matmul %101, %1, %cst_39 {dimension_numbers = #tpu.dot_dimension_numbers<[1], [0], [0], [1], [0, 0, 1, 1], [], []>} : vector<1x32xf32>, vector<32x128xf32>, vector<1x128xf32> -> vector<1x128xf32>
    %110 = arith.addf %108, %109 : vector<1x128xf32>
    %111 = arith.addf %110, %2 : vector<1x128xf32>
    %112 = arith.negf %111 : vector<1x128xf32>
    %113 = math.exp %112 : vector<1x128xf32>
    %cst_40 = arith.constant 1.000000e+00 : f32
    %114 = vector.broadcast %cst_40 : f32 to vector<1x128xf32>
    %115 = arith.addf %114, %113 : vector<1x128xf32>
    %116 = arith.divf %114, %115 : vector<1x128xf32>
    %117 = math.tanh %111 : vector<1x128xf32>
    %118 = vector.extract_strided_slice %116 {offsets = [0, 0], sizes = [1, 32], strides = [1, 1]} : vector<1x128xf32> to vector<1x32xf32>
    %119 = vector.extract_strided_slice %116 {offsets = [0, 32], sizes = [1, 32], strides = [1, 1]} : vector<1x128xf32> to vector<1x32xf32>
    %120 = vector.extract_strided_slice %117 {offsets = [0, 64], sizes = [1, 32], strides = [1, 1]} : vector<1x128xf32> to vector<1x32xf32>
    %121 = vector.extract_strided_slice %116 {offsets = [0, 96], sizes = [1, 32], strides = [1, 1]} : vector<1x128xf32> to vector<1x32xf32>
    %122 = arith.mulf %119, %99 : vector<1x32xf32>
    %123 = arith.mulf %118, %120 : vector<1x32xf32>
    %124 = arith.addf %122, %123 : vector<1x32xf32>
    %125 = math.tanh %124 : vector<1x32xf32>
    %126 = arith.mulf %121, %125 : vector<1x32xf32>
    %c4_41 = arith.constant 4 : index
    %c0_42 = arith.constant 0 : index
    %c0_43 = arith.constant 0 : index
    %127 = vector.load %arg8[%c4_41, %c0_42, %c0_43] : memref<8x1x32xf32, #tpu.memory_space<vmem>>, vector<1x1x32xf32>
    %128 = vector.shape_cast %127 : vector<1x1x32xf32> to vector<1x32xf32>
    %129 = vector.shape_cast %126 : vector<1x32xf32> to vector<1x1x32xf32>
    tpu.vector_store %arg8[%c4_41, %c0_42, %c0_43], %129 {strides = array<i32>} : memref<8x1x32xf32, #tpu.memory_space<vmem>>, vector<1x1x32xf32>,
    %c5 = arith.constant 5 : index
    %130 = memref.load %arg1[%c5] : memref<8xi32, #tpu.memory_space<smem>>
    %131 = arith.index_cast %130 : i32 to index
    %c0_44 = arith.constant 0 : index
    %132 = vector.load %arg2[%131, %c0_44] : memref<64x32xf32, #tpu.memory_space<vmem>>, vector<1x32xf32>
    %cst_45 = arith.constant dense<0.000000e+00> : vector<1x128xf32>
    %133 = tpu.matmul %132, %0, %cst_45 {dimension_numbers = #tpu.dot_dimension_numbers<[1], [0], [0], [1], [0, 0, 1, 1], [], []>} : vector<1x32xf32>, vector<32x128xf32>, vector<1x128xf32> -> vector<1x128xf32>
    %cst_46 = arith.constant dense<0.000000e+00> : vector<1x128xf32>
    %134 = tpu.matmul %126, %1, %cst_46 {dimension_numbers = #tpu.dot_dimension_numbers<[1], [0], [0], [1], [0, 0, 1, 1], [], []>} : vector<1x32xf32>, vector<32x128xf32>, vector<1x128xf32> -> vector<1x128xf32>
    %135 = arith.addf %133, %134 : vector<1x128xf32>
    %136 = arith.addf %135, %2 : vector<1x128xf32>
    %137 = arith.negf %136 : vector<1x128xf32>
    %138 = math.exp %137 : vector<1x128xf32>
    %cst_47 = arith.constant 1.000000e+00 : f32
    %139 = vector.broadcast %cst_47 : f32 to vector<1x128xf32>
    %140 = arith.addf %139, %138 : vector<1x128xf32>
    %141 = arith.divf %139, %140 : vector<1x128xf32>
    %142 = math.tanh %136 : vector<1x128xf32>
    %143 = vector.extract_strided_slice %141 {offsets = [0, 0], sizes = [1, 32], strides = [1, 1]} : vector<1x128xf32> to vector<1x32xf32>
    %144 = vector.extract_strided_slice %141 {offsets = [0, 32], sizes = [1, 32], strides = [1, 1]} : vector<1x128xf32> to vector<1x32xf32>
    %145 = vector.extract_strided_slice %142 {offsets = [0, 64], sizes = [1, 32], strides = [1, 1]} : vector<1x128xf32> to vector<1x32xf32>
    %146 = vector.extract_strided_slice %141 {offsets = [0, 96], sizes = [1, 32], strides = [1, 1]} : vector<1x128xf32> to vector<1x32xf32>
    %147 = arith.mulf %144, %124 : vector<1x32xf32>
    %148 = arith.mulf %143, %145 : vector<1x32xf32>
    %149 = arith.addf %147, %148 : vector<1x32xf32>
    %150 = math.tanh %149 : vector<1x32xf32>
    %151 = arith.mulf %146, %150 : vector<1x32xf32>
    %c5_48 = arith.constant 5 : index
    %c0_49 = arith.constant 0 : index
    %c0_50 = arith.constant 0 : index
    %152 = vector.load %arg8[%c5_48, %c0_49, %c0_50] : memref<8x1x32xf32, #tpu.memory_space<vmem>>, vector<1x1x32xf32>
    %153 = vector.shape_cast %152 : vector<1x1x32xf32> to vector<1x32xf32>
    %154 = vector.shape_cast %151 : vector<1x32xf32> to vector<1x1x32xf32>
    tpu.vector_store %arg8[%c5_48, %c0_49, %c0_50], %154 {strides = array<i32>} : memref<8x1x32xf32, #tpu.memory_space<vmem>>, vector<1x1x32xf32>,
    %c6 = arith.constant 6 : index
    %155 = memref.load %arg1[%c6] : memref<8xi32, #tpu.memory_space<smem>>
    %156 = arith.index_cast %155 : i32 to index
    %c0_51 = arith.constant 0 : index
    %157 = vector.load %arg2[%156, %c0_51] : memref<64x32xf32, #tpu.memory_space<vmem>>, vector<1x32xf32>
    %cst_52 = arith.constant dense<0.000000e+00> : vector<1x128xf32>
    %158 = tpu.matmul %157, %0, %cst_52 {dimension_numbers = #tpu.dot_dimension_numbers<[1], [0], [0], [1], [0, 0, 1, 1], [], []>} : vector<1x32xf32>, vector<32x128xf32>, vector<1x128xf32> -> vector<1x128xf32>
    %cst_53 = arith.constant dense<0.000000e+00> : vector<1x128xf32>
    %159 = tpu.matmul %151, %1, %cst_53 {dimension_numbers = #tpu.dot_dimension_numbers<[1], [0], [0], [1], [0, 0, 1, 1], [], []>} : vector<1x32xf32>, vector<32x128xf32>, vector<1x128xf32> -> vector<1x128xf32>
    %160 = arith.addf %158, %159 : vector<1x128xf32>
    %161 = arith.addf %160, %2 : vector<1x128xf32>
    %162 = arith.negf %161 : vector<1x128xf32>
    %163 = math.exp %162 : vector<1x128xf32>
    %cst_54 = arith.constant 1.000000e+00 : f32
    %164 = vector.broadcast %cst_54 : f32 to vector<1x128xf32>
    %165 = arith.addf %164, %163 : vector<1x128xf32>
    %166 = arith.divf %164, %165 : vector<1x128xf32>
    %167 = math.tanh %161 : vector<1x128xf32>
    %168 = vector.extract_strided_slice %166 {offsets = [0, 0], sizes = [1, 32], strides = [1, 1]} : vector<1x128xf32> to vector<1x32xf32>
    %169 = vector.extract_strided_slice %166 {offsets = [0, 32], sizes = [1, 32], strides = [1, 1]} : vector<1x128xf32> to vector<1x32xf32>
    %170 = vector.extract_strided_slice %167 {offsets = [0, 64], sizes = [1, 32], strides = [1, 1]} : vector<1x128xf32> to vector<1x32xf32>
    %171 = vector.extract_strided_slice %166 {offsets = [0, 96], sizes = [1, 32], strides = [1, 1]} : vector<1x128xf32> to vector<1x32xf32>
    %172 = arith.mulf %169, %149 : vector<1x32xf32>
    %173 = arith.mulf %168, %170 : vector<1x32xf32>
    %174 = arith.addf %172, %173 : vector<1x32xf32>
    %175 = math.tanh %174 : vector<1x32xf32>
    %176 = arith.mulf %171, %175 : vector<1x32xf32>
    %c6_55 = arith.constant 6 : index
    %c0_56 = arith.constant 0 : index
    %c0_57 = arith.constant 0 : index
    %177 = vector.load %arg8[%c6_55, %c0_56, %c0_57] : memref<8x1x32xf32, #tpu.memory_space<vmem>>, vector<1x1x32xf32>
    %178 = vector.shape_cast %177 : vector<1x1x32xf32> to vector<1x32xf32>
    %179 = vector.shape_cast %176 : vector<1x32xf32> to vector<1x1x32xf32>
    tpu.vector_store %arg8[%c6_55, %c0_56, %c0_57], %179 {strides = array<i32>} : memref<8x1x32xf32, #tpu.memory_space<vmem>>, vector<1x1x32xf32>,
    %c7 = arith.constant 7 : index
    %180 = memref.load %arg1[%c7] : memref<8xi32, #tpu.memory_space<smem>>
    %181 = arith.index_cast %180 : i32 to index
    %c0_58 = arith.constant 0 : index
    %182 = vector.load %arg2[%181, %c0_58] : memref<64x32xf32, #tpu.memory_space<vmem>>, vector<1x32xf32>
    %cst_59 = arith.constant dense<0.000000e+00> : vector<1x128xf32>
    %183 = tpu.matmul %182, %0, %cst_59 {dimension_numbers = #tpu.dot_dimension_numbers<[1], [0], [0], [1], [0, 0, 1, 1], [], []>} : vector<1x32xf32>, vector<32x128xf32>, vector<1x128xf32> -> vector<1x128xf32>
    %cst_60 = arith.constant dense<0.000000e+00> : vector<1x128xf32>
    %184 = tpu.matmul %176, %1, %cst_60 {dimension_numbers = #tpu.dot_dimension_numbers<[1], [0], [0], [1], [0, 0, 1, 1], [], []>} : vector<1x32xf32>, vector<32x128xf32>, vector<1x128xf32> -> vector<1x128xf32>
    %185 = arith.addf %183, %184 : vector<1x128xf32>
    %186 = arith.addf %185, %2 : vector<1x128xf32>
    %187 = arith.negf %186 : vector<1x128xf32>
    %188 = math.exp %187 : vector<1x128xf32>
    %cst_61 = arith.constant 1.000000e+00 : f32
    %189 = vector.broadcast %cst_61 : f32 to vector<1x128xf32>
    %190 = arith.addf %189, %188 : vector<1x128xf32>
    %191 = arith.divf %189, %190 : vector<1x128xf32>
    %192 = math.tanh %186 : vector<1x128xf32>
    %193 = vector.extract_strided_slice %191 {offsets = [0, 0], sizes = [1, 32], strides = [1, 1]} : vector<1x128xf32> to vector<1x32xf32>
    %194 = vector.extract_strided_slice %191 {offsets = [0, 32], sizes = [1, 32], strides = [1, 1]} : vector<1x128xf32> to vector<1x32xf32>
    %195 = vector.extract_strided_slice %192 {offsets = [0, 64], sizes = [1, 32], strides = [1, 1]} : vector<1x128xf32> to vector<1x32xf32>
    %196 = vector.extract_strided_slice %191 {offsets = [0, 96], sizes = [1, 32], strides = [1, 1]} : vector<1x128xf32> to vector<1x32xf32>
    %197 = arith.mulf %194, %174 : vector<1x32xf32>
    %198 = arith.mulf %193, %195 : vector<1x32xf32>
    %199 = arith.addf %197, %198 : vector<1x32xf32>
    %200 = math.tanh %199 : vector<1x32xf32>
    %201 = arith.mulf %196, %200 : vector<1x32xf32>
    %c7_62 = arith.constant 7 : index
    %c0_63 = arith.constant 0 : index
    %c0_64 = arith.constant 0 : index
    %202 = vector.load %arg8[%c7_62, %c0_63, %c0_64] : memref<8x1x32xf32, #tpu.memory_space<vmem>>, vector<1x1x32xf32>
    %203 = vector.shape_cast %202 : vector<1x1x32xf32> to vector<1x32xf32>
    %204 = vector.shape_cast %201 : vector<1x32xf32> to vector<1x1x32xf32>
    tpu.vector_store %arg8[%c7_62, %c0_63, %c0_64], %204 {strides = array<i32>} : memref<8x1x32xf32, #tpu.memory_space<vmem>>, vector<1x1x32xf32>,
    %c0_65 = arith.constant 0 : index
    %c0_66 = arith.constant 0 : index
    %205 = vector.load %arg9[%c0_65, %c0_66] : memref<1x32xf32, #tpu.memory_space<vmem>>, vector<1x32xf32>
    tpu.vector_store %arg9[%c0_65, %c0_66], %201 {strides = array<i32>} : memref<1x32xf32, #tpu.memory_space<vmem>>, vector<1x32xf32>,
    %c0_67 = arith.constant 0 : index
    %c0_68 = arith.constant 0 : index
    %206 = vector.load %arg10[%c0_67, %c0_68] : memref<1x32xf32, #tpu.memory_space<vmem>>, vector<1x32xf32>
    tpu.vector_store %arg10[%c0_67, %c0_68], %199 {strides = array<i32>} : memref<1x32xf32, #tpu.memory_space<vmem>>, vector<1x32xf32>,
    return
  }
  func.func @transform_0(%arg0: i32, %arg1: memref<8xi32, #tpu.memory_space<smem>>) -> (i32, i32) {
    %c0_i32 = arith.constant 0 : i32
    %c0_i32_0 = arith.constant 0 : i32
    %c0_i32_1 = arith.constant 0 : i32
    return %c0_i32, %c0_i32_0 : i32, i32
  }
  func.func @transform_1(%arg0: i32, %arg1: memref<8xi32, #tpu.memory_space<smem>>) -> (i32, i32) {
    %c0_i32 = arith.constant 0 : i32
    %c0_i32_0 = arith.constant 0 : i32
    %c0_i32_1 = arith.constant 0 : i32
    return %c0_i32, %c0_i32_0 : i32, i32
  }
  func.func @transform_2(%arg0: i32, %arg1: memref<8xi32, #tpu.memory_space<smem>>) -> (i32, i32) {
    %c0_i32 = arith.constant 0 : i32
    %c0_i32_0 = arith.constant 0 : i32
    %c0_i32_1 = arith.constant 0 : i32
    return %c0_i32, %c0_i32_0 : i32, i32
  }
  func.func @transform_3(%arg0: i32, %arg1: memref<8xi32, #tpu.memory_space<smem>>) -> (i32, i32) {
    %c0_i32 = arith.constant 0 : i32
    %c0_i32_0 = arith.constant 0 : i32
    %c0_i32_1 = arith.constant 0 : i32
    return %c0_i32, %c0_i32_0 : i32, i32
  }
  func.func @transform_4(%arg0: i32, %arg1: memref<8xi32, #tpu.memory_space<smem>>) -> (i32, i32) {
    %c0_i32 = arith.constant 0 : i32
    %c0_i32_0 = arith.constant 0 : i32
    %c0_i32_1 = arith.constant 0 : i32
    return %c0_i32, %c0_i32_0 : i32, i32
  }
  func.func @transform_5(%arg0: i32, %arg1: memref<8xi32, #tpu.memory_space<smem>>) -> (i32, i32) {
    %c0_i32 = arith.constant 0 : i32
    %c0_i32_0 = arith.constant 0 : i32
    %c0_i32_1 = arith.constant 0 : i32
    return %c0_i32, %c0_i32_0 : i32, i32
  }
  func.func @transform_6(%arg0: i32, %arg1: memref<8xi32, #tpu.memory_space<smem>>) -> (i32, i32, i32) {
    %c0_i32 = arith.constant 0 : i32
    %c0_i32_0 = arith.constant 0 : i32
    %c0_i32_1 = arith.constant 0 : i32
    %c0_i32_2 = arith.constant 0 : i32
    return %c0_i32, %c0_i32_0, %c0_i32_1 : i32, i32, i32
  }
  func.func @transform_7(%arg0: i32, %arg1: memref<8xi32, #tpu.memory_space<smem>>) -> (i32, i32) {
    %c0_i32 = arith.constant 0 : i32
    %c0_i32_0 = arith.constant 0 : i32
    %c0_i32_1 = arith.constant 0 : i32
    return %c0_i32, %c0_i32_0 : i32, i32
  }
  func.func @transform_8(%arg0: i32, %arg1: memref<8xi32, #tpu.memory_space<smem>>) -> (i32, i32) {
    %c0_i32 = arith.constant 0 : i32
    %c0_i32_0 = arith.constant 0 : i32
    %c0_i32_1 = arith.constant 0 : i32
    return %c0_i32, %c0_i32_0 : i32, i32
  }
}

</mosaic_0001>

<llo_original>
// kernel: tpu_custom_call.1
$region0: #{tpu_custom_call.1}
  #allocation0 [shape = 'u32[]', space=smem, size = 0x4, offset = 0x4, fixed_abs, tag = 'smem constant byte address 0x4 - core index']
  #allocation1 [shape = 'u32[144,128]{1,0:T(1,128)}', space=vmem, size = 0x12000, scoped, tag = 'internal scratch']
  #allocation2 [shape = 's32[1]{0}', space=sflag, size = 0x4, scoped, tag = 'scoped memory for tpu_custom_call.1']
  #allocation3 [shape = 'u8[512]{0}', space=smem, size = 0x200, scoped, tag = 'prefetched SMEM operand 0']
  %s0 = inlined_call_operand.vmem [shape: s32[8], index: 0, kind: input, shape index: {}]
  %s1 = inlined_call_operand.vmem [shape: f32[64,32], index: 1, kind: input, shape index: {}]
  %s2 = inlined_call_operand.vmem [shape: f32[1,32], index: 2, kind: input, shape index: {}]
  %s3 = inlined_call_operand.vmem [shape: f32[1,32], index: 3, kind: input, shape index: {}]
  %s4 = inlined_call_operand.vmem [shape: f32[32,128], index: 4, kind: input, shape index: {}]
  %s5 = inlined_call_operand.vmem [shape: f32[32,128], index: 5, kind: input, shape index: {}]
  %s6 = inlined_call_operand.vmem [shape: f32[1,128], index: 6, kind: input, shape index: {}]
  %s7 = inlined_call_operand.hbm [shape: f32[8,1,32], index: 7, kind: output, shape index: {0}]
  %s8 = inlined_call_operand.hbm [shape: f32[1,32], index: 8, kind: output, shape index: {1}]
  %s9 = inlined_call_operand.hbm [shape: f32[1,32], index: 9, kind: output, shape index: {2}]
  %10 = xla_tuple %s7, %s8, %s9
  %s11 = sld [smem:[#allocation0]]
  $region50: #{tpu_custom_call.1} parent=0
    _
  %s13 = ssub.s32 1, %s11
  %s14 = scalar_select 0, %s13, %s11
  %s15 = sshll.u32 %s0, 4
  %s16 = int_to_ptr.vmem [resolvable:$true] %s15
  %18 = dma.vmem_to_smem %s16, 16, [#allocation3], [#allocation2]
  %19 = dma.done [#allocation2], 16
  %20 = sfence
  $region1: #{tpu_custom_call.1} parent=0
    #allocation4 [shape = 'u8[4096]{0}', space=vmem, size = 0x1000, scoped, tag = 'output window, operand 0, single buffered']
    #allocation5 [shape = 's32[1]{0}', space=sflag, size = 0x4, scoped, tag = 'scoped memory for tpu_custom_call.1']
    #allocation6 [shape = 'u8[512]{0}', space=vmem, size = 0x400, scoped, tag = 'output window, operand 1, single buffered']
    #allocation7 [shape = 's32[1]{0}', space=sflag, size = 0x4, scoped, tag = 'scoped memory for tpu_custom_call.1']
    #allocation8 [shape = 'u8[512]{0}', space=vmem, size = 0x400, scoped, tag = 'output window, operand 2, single buffered']
    %21 = vsyncpa [#allocation5], 0
    %22 = vsyncpa [#allocation7], 0
    // Predicated region
    $region2: #{tpu_custom_call.1} parent=1 // pred_check
      _
    $region3: #{tpu_custom_call.1} parent=1 // pred_check_branch
      %24 = sbr.rel (0) target = $region5
    $region4: #{tpu_custom_call.1} parent=1 // pred_region
      _
    $region5: #{tpu_custom_call.1} parent=1 // pred_fallthru
      _
    // Predicated region
    $region6: #{tpu_custom_call.1} parent=1 // pred_check
      _
    $region7: #{tpu_custom_call.1} parent=1 // pred_check_branch
      %26 = sbr.rel (0) target = $region9
    $region8: #{tpu_custom_call.1} parent=1 // pred_region
      _
    $region9: #{tpu_custom_call.1} parent=1 // pred_fallthru
      _
    // Predicated region
    $region10: #{tpu_custom_call.1} parent=1 // pred_check
      _
    $region11: #{tpu_custom_call.1} parent=1 // pred_check_branch
      %28 = sbr.rel (0) target = $region13
    $region12: #{tpu_custom_call.1} parent=1 // pred_region
      _
    $region13: #{tpu_custom_call.1} parent=1 // pred_fallthru
      _
    // Predicated region
    $region14: #{tpu_custom_call.1} parent=1 // pred_check
      _
    $region15: #{tpu_custom_call.1} parent=1 // pred_check_branch
      %30 = sbr.rel (0) target = $region17
    $region16: #{tpu_custom_call.1} parent=1 // pred_region
      _
    $region17: #{tpu_custom_call.1} parent=1 // pred_fallthru
      _
    // Predicated region
    $region18: #{tpu_custom_call.1} parent=1 // pred_check
      _
    $region19: #{tpu_custom_call.1} parent=1 // pred_check_branch
      %32 = sbr.rel (0) target = $region21
    $region20: #{tpu_custom_call.1} parent=1 // pred_region
      _
    $region21: #{tpu_custom_call.1} parent=1 // pred_fallthru
      _
    // Predicated region
    $region22: #{tpu_custom_call.1} parent=1 // pred_check
      _
    $region23: #{tpu_custom_call.1} parent=1 // pred_check_branch
      %34 = sbr.rel (0) target = $region25
    $region24: #{tpu_custom_call.1} parent=1 // pred_region
      _
    $region25: #{tpu_custom_call.1} parent=1 // pred_fallthru
      _
    %v35 = vld [vmem:[%s4] sm:$0xff]
    %v36 = vld [vmem:[%s4 + $0x8] sm:$0xff]
    %v37 = vld [vmem:[%s4 + $0x10] sm:$0xff]
    %v38 = vld [vmem:[%s4 + $0x18] sm:$0xff]
    %v39 = vld [vmem:[%s5] sm:$0xff]
    %v40 = vld [vmem:[%s5 + $0x8] sm:$0xff]
    %v41 = vld [vmem:[%s5 + $0x10] sm:$0xff]
    %v42 = vld [vmem:[%s5 + $0x18] sm:$0xff]
    %v43 = vld [vmem:[%s6] sm:$0x1]
    %v44 = vld [vmem:[%s2] sm:$0x1]
    %v45 = vld [vmem:[%s3] sm:$0x1]
    %s46 = sld [smem:[#allocation3]]
    %s47 = scalar_lea.vmem %s1, %s46
    %v48 = vld [vmem:[%s47] sm:$0x1]
    %vm49 = vcmask 261120
    %v51 = vsel %vm49, %v44, 0
    %53 = vmatprep.subr.mxu0 0.0
    %54 = vmatpush1.msra.mxu0 %v39
    %55 = vmatprep.subr.mxu0 0.0
    %56 = vmatpush1.msra.mxu0 %v40
    %57 = vmatprep.subr.mxu0 0.0
    %58 = vmatpush1.msra.mxu0 %v41
    %59 = vmatprep.subr.mxu0 0.0
    %60 = vmatpush1.msra.mxu0 %v42
    %61 = vmatprep.subr.mxu0 0.0
    %62 = vmatpush1.msra.mxu0 0.0
    %63 = vmatprep.subr.mxu0 0.0
    %64 = vmatpush1.msra.mxu0 0.0
    %65 = vmatprep.subr.mxu0 0.0
    %66 = vmatpush1.msra.mxu0 0.0
    %67 = vmatprep.subr.mxu0 0.0
    %68 = vmatpush1.msra.mxu0 0.0
    %69 = vmatprep.subr.mxu0 0.0
    %70 = vmatpush1.msra.mxu0 0.0
    %71 = vmatprep.subr.mxu0 0.0
    %72 = vmatpush1.msra.mxu0 0.0
    %73 = vmatprep.subr.mxu0 0.0
    %74 = vmatpush1.msra.mxu0 0.0
    %75 = vmatprep.subr.mxu0 0.0
    %76 = vmatpush1.msra.mxu0 0.0
    %77 = vmatprep.subr.mxu0 0.0
    %78 = vmatpush1.msra.mxu0 0.0
    %79 = vmatprep.subr.mxu0 0.0
    %80 = vmatpush1.msra.mxu0 0.0
    %81 = vmatprep.subr.mxu0 0.0
    %82 = vmatpush1.msra.mxu0 0.0
    %83 = vmatprep.subr.mxu0 0.0
    %84 = vmatpush1.msra.mxu0 0.0
    %85 = vmatprep.subr.mxu0 0.0
    %86 = vmatpush1.msra.mxu0 0.0
    %87 = vmatprep.subr.mxu0 0.0
    %88 = vmatpush1.msra.mxu0 0.0
    %89 = vmatprep.subr.mxu0 0.0
    %90 = vmatpush1.msra.mxu0 0.0
    %91 = vmatprep.subr.mxu0 0.0
    %92 = vmatpush1.msra.mxu0 0.0
    %93 = vmatprep.subr.mxu0 0.0
    %94 = vmatpush1.msra.mxu0 0.0
    %95 = vmatprep.subr.mxu0 0.0
    %96 = vmatpush1.msra.mxu0 0.0
    %97 = vmatprep.subr.mxu0 0.0
    %98 = vmatpush1.msra.mxu0 0.0
    %99 = vmatprep.subr.mxu0 0.0
    %100 = vmatpush1.msra.mxu0 0.0
    %101 = vmatprep.subr.mxu0 0.0
    %102 = vmatpush1.msra.mxu0 0.0
    %103 = vmatprep.subr.mxu0 0.0
    %104 = vmatpush1.msra.mxu0 0.0
    %105 = vmatprep.subr.mxu0 0.0
    %106 = vmatpush1.msra.mxu0 0.0
    %107 = vmatprep.subr.mxu0 0.0
    %108 = vmatpush1.msra.mxu0 0.0
    %109 = vmatprep.subr.mxu0 0.0
    %110 = vmatpush1.msra.mxu0 0.0
    %111 = vmatprep.subr.mxu0 0.0
    %112 = vmatpush1.msra.mxu0 0.0
    %113 = vmatprep.subr.mxu0 0.0
    %114 = vmatpush1.msra.mxu0 0.0
    %115 = vmatprep.subr.mxu0 0.0
    %116 = vmatpush1.msra.mxu0 0.0
    %117 = vmatprep.mubr.f32.mxu0 0.0
    %118 = vmatmul.mubr.f32.gmra.mrb[0].mxu0 %v51
    %v119 = vpop.f32.mrb[0].mxu0
    %v120 = vadd.f32 0.0, %v119
    %v121 = vpop.f32.mrb[0].mxu0
    %122 = vdwg.mxu0
    %v124 = vsel %vm49, %v48, 0
    %126 = vmatprep.subr.mxu0 0.0
    %127 = vmatpush1.msra.mxu0 %v35
    %128 = vmatprep.subr.mxu0 0.0
    %129 = vmatpush1.msra.mxu0 %v36
    %130 = vmatprep.subr.mxu0 0.0
    %131 = vmatpush1.msra.mxu0 %v37
    %132 = vmatprep.subr.mxu0 0.0
    %133 = vmatpush1.msra.mxu0 %v38
    %134 = vmatprep.subr.mxu0 0.0
    %135 = vmatpush1.msra.mxu0 0.0
    %136 = vmatprep.subr.mxu0 0.0
    %137 = vmatpush1.msra.mxu0 0.0
    %138 = vmatprep.subr.mxu0 0.0
    %139 = vmatpush1.msra.mxu0 0.0
    %140 = vmatprep.subr.mxu0 0.0
    %141 = vmatpush1.msra.mxu0 0.0
    %142 = vmatprep.subr.mxu0 0.0
    %143 = vmatpush1.msra.mxu0 0.0
    %144 = vmatprep.subr.mxu0 0.0
    %145 = vmatpush1.msra.mxu0 0.0
    %146 = vmatprep.subr.mxu0 0.0
    %147 = vmatpush1.msra.mxu0 0.0
    %148 = vmatprep.subr.mxu0 0.0
    %149 = vmatpush1.msra.mxu0 0.0
    %150 = vmatprep.subr.mxu0 0.0
    %151 = vmatpush1.msra.mxu0 0.0
    %152 = vmatprep.subr.mxu0 0.0
    %153 = vmatpush1.msra.mxu0 0.0
    %154 = vmatprep.subr.mxu0 0.0
    %155 = vmatpush1.msra.mxu0 0.0
    %156 = vmatprep.subr.mxu0 0.0
    %157 = vmatpush1.msra.mxu0 0.0
    %158 = vmatprep.subr.mxu0 0.0
    %159 = vmatpush1.msra.mxu0 0.0
    %160 = vmatprep.subr.mxu0 0.0
    %161 = vmatpush1.msra.mxu0 0.0
    %162 = vmatprep.subr.mxu0 0.0
    %163 = vmatpush1.msra.mxu0 0.0
    %164 = vmatprep.subr.mxu0 0.0
    %165 = vmatpush1.msra.mxu0 0.0
    %166 = vmatprep.subr.mxu0 0.0
    %167 = vmatpush1.msra.mxu0 0.0
    %168 = vmatprep.subr.mxu0 0.0
    %169 = vmatpush1.msra.mxu0 0.0
    %170 = vmatprep.subr.mxu0 0.0
    %171 = vmatpush1.msra.mxu0 0.0
    %172 = vmatprep.subr.mxu0 0.0
    %173 = vmatpush1.msra.mxu0 0.0
    %174 = vmatprep.subr.mxu0 0.0
    %175 = vmatpush1.msra.mxu0 0.0
    %176 = vmatprep.subr.mxu0 0.0
    %177 = vmatpush1.msra.mxu0 0.0
    %178 = vmatprep.subr.mxu0 0.0
    %179 = vmatpush1.msra.mxu0 0.0
    %180 = vmatprep.subr.mxu0 0.0
    %181 = vmatpush1.msra.mxu0 0.0
    %182 = vmatprep.subr.mxu0 0.0
    %183 = vmatpush1.msra.mxu0 0.0
    %184 = vmatprep.subr.mxu0 0.0
    %185 = vmatpush1.msra.mxu0 0.0
    %186 = vmatprep.subr.mxu0 0.0
    %187 = vmatpush1.msra.mxu0 0.0
    %188 = vmatprep.subr.mxu0 0.0
    %189 = vmatpush1.msra.mxu0 0.0
    %190 = vmatprep.mubr.f32.mxu0 0.0
    %191 = vmatmul.mubr.f32.gmra.mrb[0].mxu0 %v124
    %v192 = vpop.f32.mrb[0].mxu0
    %v193 = vadd.f32 %v120, %v192
    %v194 = vpop.f32.mrb[0].mxu0
    %195 = vdwg.mxu0
    %v196 = vadd.f32 %v193, %v43
    %v197 = vxor.u32 %v196, 2147483648
    %v198 = vmul.f32 %v197, 1.442695
    %v199 = vpow.pop %v198
    %v200 = vadd.f32 %v199, 1.0
    %v201 = vrcp.pop %v200
    %v202 = vmul.f32 1.0, %v201
    %v203 = vtanh.pop %v196
    %v205 = vlaneseq
    %v206 = vshrl.u32 %v205, 7
    %v207 = vsub.s32 0, %v206
    %v208 = vrot.slane %v45, %v207
    %209 = vrot.lane.b32.xlu0 %v208, 32
    %v210 = vpop.permute.xlu0 %209
    %v212 = vmul.f32 %v202, %v210
    %214 = vrot.lane.b32.xlu0 %v203, 64
    %v215 = vpop.permute.xlu0 %214
    %v217 = vmul.f32 %v202, %v215
    %219 = vrot.lane.b32.xlu0 %v217, 32
    %v220 = vpop.permute.xlu0 %219
    %v222 = vadd.f32 %v212, %v220
    %v223 = vtanh.pop %v222
    %225 = vrot.lane.b32.xlu0 %v223, 64
    %v226 = vpop.permute.xlu0 %225
    %v228 = vmul.f32 %v202, %v226
    %230 = vrot.lane.b32.xlu0 %v228, 32
    %v231 = vpop.permute.xlu0 %230
    %vm233 = vcmask 253952
    %234 = vst.msk [vmem:[#allocation4] sm:$0x1] %vm233, %v231
    %s235 = sld [smem:[#allocation3 + $0x1]]
    %s236 = scalar_lea.vmem %s1, %s235
    %v237 = vld [vmem:[%s236] sm:$0x1]
    %v238 = vsel %vm49, %v231, 0
    %240 = vmatprep.subr.mxu0 0.0
    %241 = vmatpush1.msra.mxu0 %v39
    %242 = vmatprep.subr.mxu0 0.0
    %243 = vmatpush1.msra.mxu0 %v40
    %244 = vmatprep.subr.mxu0 0.0
    %245 = vmatpush1.msra.mxu0 %v41
    %246 = vmatprep.subr.mxu0 0.0
    %247 = vmatpush1.msra.mxu0 %v42
    %248 = vmatprep.subr.mxu0 0.0
    %249 = vmatpush1.msra.mxu0 0.0
    %250 = vmatprep.subr.mxu0 0.0
    %251 = vmatpush1.msra.mxu0 0.0
    %252 = vmatprep.subr.mxu0 0.0
    %253 = vmatpush1.msra.mxu0 0.0
    %254 = vmatprep.subr.mxu0 0.0
    %255 = vmatpush1.msra.mxu0 0.0
    %256 = vmatprep.subr.mxu0 0.0
    %257 = vmatpush1.msra.mxu0 0.0
    %258 = vmatprep.subr.mxu0 0.0
    %259 = vmatpush1.msra.mxu0 0.0
    %260 = vmatprep.subr.mxu0 0.0
    %261 = vmatpush1.msra.mxu0 0.0
    %262 = vmatprep.subr.mxu0 0.0
    %263 = vmatpush1.msra.mxu0 0.0
    %264 = vmatprep.subr.mxu0 0.0
    %265 = vmatpush1.msra.mxu0 0.0
    %266 = vmatprep.subr.mxu0 0.0
    %267 = vmatpush1.msra.mxu0 0.0
    %268 = vmatprep.subr.mxu0 0.0
    %269 = vmatpush1.msra.mxu0 0.0
    %270 = vmatprep.subr.mxu0 0.0
    %271 = vmatpush1.msra.mxu0 0.0
    %272 = vmatprep.subr.mxu0 0.0
    %273 = vmatpush1.msra.mxu0 0.0
    %274 = vmatprep.subr.mxu0 0.0
    %275 = vmatpush1.msra.mxu0 0.0
    %276 = vmatprep.subr.mxu0 0.0
    %277 = vmatpush1.msra.mxu0 0.0
    %278 = vmatprep.subr.mxu0 0.0
    %279 = vmatpush1.msra.mxu0 0.0
    %280 = vmatprep.subr.mxu0 0.0
    %281 = vmatpush1.msra.mxu0 0.0
    %282 = vmatprep.subr.mxu0 0.0
    %283 = vmatpush1.msra.mxu0 0.0
    %284 = vmatprep.subr.mxu0 0.0
    %285 = vmatpush1.msra.mxu0 0.0
    %286 = vmatprep.subr.mxu0 0.0
    %287 = vmatpush1.msra.mxu0 0.0
    %288 = vmatprep.subr.mxu0 0.0
    %289 = vmatpush1.msra.mxu0 0.0
    %290 = vmatprep.subr.mxu0 0.0
    %291 = vmatpush1.msra.mxu0 0.0
    %292 = vmatprep.subr.mxu0 0.0
    %293 = vmatpush1.msra.mxu0 0.0
    %294 = vmatprep.subr.mxu0 0.0
    %295 = vmatpush1.msra.mxu0 0.0
    %296 = vmatprep.subr.mxu0 0.0
    %297 = vmatpush1.msra.mxu0 0.0
    %298 = vmatprep.subr.mxu0 0.0
    %299 = vmatpush1.msra.mxu0 0.0
    %300 = vmatprep.subr.mxu0 0.0
    %301 = vmatpush1.msra.mxu0 0.0
    %302 = vmatprep.subr.mxu0 0.0
    %303 = vmatpush1.msra.mxu0 0.0
    %304 = vmatprep.mubr.f32.mxu0 0.0
    %305 = vmatmul.mubr.f32.gmra.mrb[0].mxu0 %v238
    %v306 = vpop.f32.mrb[0].mxu0
    %v307 = vadd.f32 0.0, %v306
    %v308 = vpop.f32.mrb[0].mxu0
    %309 = vdwg.mxu0
    %v311 = vsel %vm49, %v237, 0
    %313 = vmatprep.subr.mxu0 0.0
    %314 = vmatpush1.msra.mxu0 %v35
    %315 = vmatprep.subr.mxu0 0.0
    %316 = vmatpush1.msra.mxu0 %v36
    %317 = vmatprep.subr.mxu0 0.0
    %318 = vmatpush1.msra.mxu0 %v37
    %319 = vmatprep.subr.mxu0 0.0
    %320 = vmatpush1.msra.mxu0 %v38
    %321 = vmatprep.subr.mxu0 0.0
    %322 = vmatpush1.msra.mxu0 0.0
    %323 = vmatprep.subr.mxu0 0.0
    %324 = vmatpush1.msra.mxu0 0.0
    %325 = vmatprep.subr.mxu0 0.0
    %326 = vmatpush1.msra.mxu0 0.0
    %327 = vmatprep.subr.mxu0 0.0
    %328 = vmatpush1.msra.mxu0 0.0
    %329 = vmatprep.subr.mxu0 0.0
    %330 = vmatpush1.msra.mxu0 0.0
    %331 = vmatprep.subr.mxu0 0.0
    %332 = vmatpush1.msra.mxu0 0.0
    %333 = vmatprep.subr.mxu0 0.0
    %334 = vmatpush1.msra.mxu0 0.0
    %335 = vmatprep.subr.mxu0 0.0
    %336 = vmatpush1.msra.mxu0 0.0
    %337 = vmatprep.subr.mxu0 0.0
    %338 = vmatpush1.msra.mxu0 0.0
    %339 = vmatprep.subr.mxu0 0.0
    %340 = vmatpush1.msra.mxu0 0.0
    %341 = vmatprep.subr.mxu0 0.0
    %342 = vmatpush1.msra.mxu0 0.0
    %343 = vmatprep.subr.mxu0 0.0
    %344 = vmatpush1.msra.mxu0 0.0
    %345 = vmatprep.subr.mxu0 0.0
    %346 = vmatpush1.msra.mxu0 0.0
    %347 = vmatprep.subr.mxu0 0.0
    %348 = vmatpush1.msra.mxu0 0.0
    %349 = vmatprep.subr.mxu0 0.0
    %350 = vmatpush1.msra.mxu0 0.0
    %351 = vmatprep.subr.mxu0 0.0
    %352 = vmatpush1.msra.mxu0 0.0
    %353 = vmatprep.subr.mxu0 0.0
    %354 = vmatpush1.msra.mxu0 0.0
    %355 = vmatprep.subr.mxu0 0.0
    %356 = vmatpush1.msra.mxu0 0.0
    %357 = vmatprep.subr.mxu0 0.0
    %358 = vmatpush1.msra.mxu0 0.0
    %359 = vmatprep.subr.mxu0 0.0
    %360 = vmatpush1.msra.mxu0 0.0
    %361 = vmatprep.subr.mxu0 0.0
    %362 = vmatpush1.msra.mxu0 0.0
    %363 = vmatprep.subr.mxu0 0.0
    %364 = vmatpush1.msra.mxu0 0.0
    %365 = vmatprep.subr.mxu0 0.0
    %366 = vmatpush1.msra.mxu0 0.0
    %367 = vmatprep.subr.mxu0 0.0
    %368 = vmatpush1.msra.mxu0 0.0
    %369 = vmatprep.subr.mxu0 0.0
    %370 = vmatpush1.msra.mxu0 0.0
    %371 = vmatprep.subr.mxu0 0.0
    %372 = vmatpush1.msra.mxu0 0.0
    %373 = vmatprep.subr.mxu0 0.0
    %374 = vmatpush1.msra.mxu0 0.0
    %375 = vmatprep.subr.mxu0 0.0
    %376 = vmatpush1.msra.mxu0 0.0
    %377 = vmatprep.mubr.f32.mxu0 0.0
    %378 = vmatmul.mubr.f32.gmra.mrb[0].mxu0 %v311
    %v379 = vpop.f32.mrb[0].mxu0
    %v380 = vadd.f32 %v307, %v379
    %v381 = vpop.f32.mrb[0].mxu0
    %382 = vdwg.mxu0
    %v383 = vadd.f32 %v380, %v43
    %v384 = vxor.u32 %v383, 2147483648
    %v385 = vmul.f32 %v384, 1.442695
    %v386 = vpow.pop %v385
    %v387 = vadd.f32 %v386, 1.0
    %v388 = vrcp.pop %v387
    %v389 = vmul.f32 1.0, %v388
    %v390 = vtanh.pop %v383
    %v391 = vmul.f32 %v389, %v222
    %393 = vrot.lane.b32.xlu0 %v390, 64
    %v394 = vpop.permute.xlu0 %393
    %v396 = vmul.f32 %v389, %v394
    %398 = vrot.lane.b32.xlu0 %v396, 32
    %v399 = vpop.permute.xlu0 %398
    %v401 = vadd.f32 %v391, %v399
    %v402 = vtanh.pop %v401
    %404 = vrot.lane.b32.xlu0 %v402, 64
    %v405 = vpop.permute.xlu0 %404
    %v407 = vmul.f32 %v389, %v405
    %409 = vrot.lane.b32.xlu0 %v407, 32
    %v410 = vpop.permute.xlu0 %409
    %s412 = scalar_lea.vmem [#allocation4], 1
    %413 = vst.msk [vmem:[%s412] sm:$0x1] %vm233, %v410
    %s414 = sld [smem:[#allocation3 + $0x2]]
    %s415 = scalar_lea.vmem %s1, %s414
    %v416 = vld [vmem:[%s415] sm:$0x1]
    %v417 = vsel %vm49, %v410, 0
    %419 = vmatprep.subr.mxu0 0.0
    %420 = vmatpush1.msra.mxu0 %v39
    %421 = vmatprep.subr.mxu0 0.0
    %422 = vmatpush1.msra.mxu0 %v40
    %423 = vmatprep.subr.mxu0 0.0
    %424 = vmatpush1.msra.mxu0 %v41
    %425 = vmatprep.subr.mxu0 0.0
    %426 = vmatpush1.msra.mxu0 %v42
    %427 = vmatprep.subr.mxu0 0.0
    %428 = vmatpush1.msra.mxu0 0.0
    %429 = vmatprep.subr.mxu0 0.0
    %430 = vmatpush1.msra.mxu0 0.0
    %431 = vmatprep.subr.mxu0 0.0
    %432 = vmatpush1.msra.mxu0 0.0
    %433 = vmatprep.subr.mxu0 0.0
    %434 = vmatpush1.msra.mxu0 0.0
    %435 = vmatprep.subr.mxu0 0.0
    %436 = vmatpush1.msra.mxu0 0.0
    %437 = vmatprep.subr.mxu0 0.0
    %438 = vmatpush1.msra.mxu0 0.0
    %439 = vmatprep.subr.mxu0 0.0
    %440 = vmatpush1.msra.mxu0 0.0
    %441 = vmatprep.subr.mxu0 0.0
    %442 = vmatpush1.msra.mxu0 0.0
    %443 = vmatprep.subr.mxu0 0.0
    %444 = vmatpush1.msra.mxu0 0.0
    %445 = vmatprep.subr.mxu0 0.0
    %446 = vmatpush1.msra.mxu0 0.0
    %447 = vmatprep.subr.mxu0 0.0
    %448 = vmatpush1.msra.mxu0 0.0
    %449 = vmatprep.subr.mxu0 0.0
    %450 = vmatpush1.msra.mxu0 0.0
    %451 = vmatprep.subr.mxu0 0.0
    %452 = vmatpush1.msra.mxu0 0.0
    %453 = vmatprep.subr.mxu0 0.0
    %454 = vmatpush1.msra.mxu0 0.0
    %455 = vmatprep.subr.mxu0 0.0
    %456 = vmatpush1.msra.mxu0 0.0
    %457 = vmatprep.subr.mxu0 0.0
    %458 = vmatpush1.msra.mxu0 0.0
    %459 = vmatprep.subr.mxu0 0.0
    %460 = vmatpush1.msra.mxu0 0.0
    %461 = vmatprep.subr.mxu0 0.0
    %462 = vmatpush1.msra.mxu0 0.0
    %463 = vmatprep.subr.mxu0 0.0
    %464 = vmatpush1.msra.mxu0 0.0
    %465 = vmatprep.subr.mxu0 0.0
    %466 = vmatpush1.msra.mxu0 0.0
    %467 = vmatprep.subr.mxu0 0.0
    %468 = vmatpush1.msra.mxu0 0.0
    %469 = vmatprep.subr.mxu0 0.0
    %470 = vmatpush1.msra.mxu0 0.0
    %471 = vmatprep.subr.mxu0 0.0
    %472 = vmatpush1.msra.mxu0 0.0
    %473 = vmatprep.subr.mxu0 0.0
    %474 = vmatpush1.msra.mxu0 0.0
    %475 = vmatprep.subr.mxu0 0.0
    %476 = vmatpush1.msra.mxu0 0.0
    %477 = vmatprep.subr.mxu0 0.0
    %478 = vmatpush1.msra.mxu0 0.0
    %479 = vmatprep.subr.mxu0 0.0
    %480 = vmatpush1.msra.mxu0 0.0
    %481 = vmatprep.subr.mxu0 0.0
    %482 = vmatpush1.msra.mxu0 0.0
    %483 = vmatprep.mubr.f32.mxu0 0.0
    %484 = vmatmul.mubr.f32.gmra.mrb[0].mxu0 %v417
    %v485 = vpop.f32.mrb[0].mxu0
    %v486 = vadd.f32 0.0, %v485
    %v487 = vpop.f32.mrb[0].mxu0
    %488 = vdwg.mxu0
    %v490 = vsel %vm49, %v416, 0
    %492 = vmatprep.subr.mxu0 0.0
    %493 = vmatpush1.msra.mxu0 %v35
    %494 = vmatprep.subr.mxu0 0.0
    %495 = vmatpush1.msra.mxu0 %v36
    %496 = vmatprep.subr.mxu0 0.0
    %497 = vmatpush1.msra.mxu0 %v37
    %498 = vmatprep.subr.mxu0 0.0
    %499 = vmatpush1.msra.mxu0 %v38
    %500 = vmatprep.subr.mxu0 0.0
    %501 = vmatpush1.msra.mxu0 0.0
    %502 = vmatprep.subr.mxu0 0.0
    %503 = vmatpush1.msra.mxu0 0.0
    %504 = vmatprep.subr.mxu0 0.0
    %505 = vmatpush1.msra.mxu0 0.0
    %506 = vmatprep.subr.mxu0 0.0
    %507 = vmatpush1.msra.mxu0 0.0
    %508 = vmatprep.subr.mxu0 0.0
    %509 = vmatpush1.msra.mxu0 0.0
    %510 = vmatprep.subr.mxu0 0.0
    %511 = vmatpush1.msra.mxu0 0.0
    %512 = vmatprep.subr.mxu0 0.0
    %513 = vmatpush1.msra.mxu0 0.0
    %514 = vmatprep.subr.mxu0 0.0
    %515 = vmatpush1.msra.mxu0 0.0
    %516 = vmatprep.subr.mxu0 0.0
    %517 = vmatpush1.msra.mxu0 0.0
    %518 = vmatprep.subr.mxu0 0.0
    %519 = vmatpush1.msra.mxu0 0.0
    %520 = vmatprep.subr.mxu0 0.0
    %521 = vmatpush1.msra.mxu0 0.0
    %522 = vmatprep.subr.mxu0 0.0
    %523 = vmatpush1.msra.mxu0 0.0
    %524 = vmatprep.subr.mxu0 0.0
    %525 = vmatpush1.msra.mxu0 0.0
    %526 = vmatprep.subr.mxu0 0.0
    %527 = vmatpush1.msra.mxu0 0.0
    %528 = vmatprep.subr.mxu0 0.0
    %529 = vmatpush1.msra.mxu0 0.0
    %530 = vmatprep.subr.mxu0 0.0
    %531 = vmatpush1.msra.mxu0 0.0
    %532 = vmatprep.subr.mxu0 0.0
    %533 = vmatpush1.msra.mxu0 0.0
    %534 = vmatprep.subr.mxu0 0.0
    %535 = vmatpush1.msra.mxu0 0.0
    %536 = vmatprep.subr.mxu0 0.0
    %537 = vmatpush1.msra.mxu0 0.0
    %538 = vmatprep.subr.mxu0 0.0
    %539 = vmatpush1.msra.mxu0 0.0
    %540 = vmatprep.subr.mxu0 0.0
    %541 = vmatpush1.msra.mxu0 0.0
    %542 = vmatprep.subr.mxu0 0.0
    %543 = vmatpush1.msra.mxu0 0.0
    %544 = vmatprep.subr.mxu0 0.0
    %545 = vmatpush1.msra.mxu0 0.0
    %546 = vmatprep.subr.mxu0 0.0
    %547 = vmatpush1.msra.mxu0 0.0
    %548 = vmatprep.subr.mxu0 0.0
    %549 = vmatpush1.msra.mxu0 0.0
    %550 = vmatprep.subr.mxu0 0.0
    %551 = vmatpush1.msra.mxu0 0.0
    %552 = vmatprep.subr.mxu0 0.0
    %553 = vmatpush1.msra.mxu0 0.0
    %554 = vmatprep.subr.mxu0 0.0
    %555 = vmatpush1.msra.mxu0 0.0
    %556 = vmatprep.mubr.f32.mxu0 0.0
    %557 = vmatmul.mubr.f32.gmra.mrb[0].mxu0 %v490
    %v558 = vpop.f32.mrb[0].mxu0
    %v559 = vadd.f32 %v486, %v558
    %v560 = vpop.f32.mrb[0].mxu0
    %561 = vdwg.mxu0
    %v562 = vadd.f32 %v559, %v43
    %v563 = vxor.u32 %v562, 2147483648
    %v564 = vmul.f32 %v563, 1.442695
    %v565 = vpow.pop %v564
    %v566 = vadd.f32 %v565, 1.0
    %v567 = vrcp.pop %v566
    %v568 = vmul.f32 1.0, %v567
    %v569 = vtanh.pop %v562
    %v570 = vmul.f32 %v568, %v401
    %572 = vrot.lane.b32.xlu0 %v569, 64
    %v573 = vpop.permute.xlu0 %572
    %v575 = vmul.f32 %v568, %v573
    %577 = vrot.lane.b32.xlu0 %v575, 32
    %v578 = vpop.permute.xlu0 %577
    %v580 = vadd.f32 %v570, %v578
    %v581 = vtanh.pop %v580
    %583 = vrot.lane.b32.xlu0 %v581, 64
    %v584 = vpop.permute.xlu0 %583
    %v586 = vmul.f32 %v568, %v584
    %588 = vrot.lane.b32.xlu0 %v586, 32
    %v589 = vpop.permute.xlu0 %588
    %s591 = scalar_lea.vmem [#allocation4], 2
    %592 = vst.msk [vmem:[%s591] sm:$0x1] %vm233, %v589
    %s593 = sld [smem:[#allocation3 + $0x3]]
    %s594 = scalar_lea.vmem %s1, %s593
    %v595 = vld [vmem:[%s594] sm:$0x1]
    %v596 = vsel %vm49, %v589, 0
    %598 = vmatprep.subr.mxu0 0.0
    %599 = vmatpush1.msra.mxu0 %v39
    %600 = vmatprep.subr.mxu0 0.0
    %601 = vmatpush1.msra.mxu0 %v40
    %602 = vmatprep.subr.mxu0 0.0
    %603 = vmatpush1.msra.mxu0 %v41
    %604 = vmatprep.subr.mxu0 0.0
    %605 = vmatpush1.msra.mxu0 %v42
    %606 = vmatprep.subr.mxu0 0.0
    %607 = vmatpush1.msra.mxu0 0.0
    %608 = vmatprep.subr.mxu0 0.0
    %609 = vmatpush1.msra.mxu0 0.0
    %610 = vmatprep.subr.mxu0 0.0
    %611 = vmatpush1.msra.mxu0 0.0
    %612 = vmatprep.subr.mxu0 0.0
    %613 = vmatpush1.msra.mxu0 0.0
    %614 = vmatprep.subr.mxu0 0.0
    %615 = vmatpush1.msra.mxu0 0.0
    %616 = vmatprep.subr.mxu0 0.0
    %617 = vmatpush1.msra.mxu0 0.0
    %618 = vmatprep.subr.mxu0 0.0
    %619 = vmatpush1.msra.mxu0 0.0
    %620 = vmatprep.subr.mxu0 0.0
    %621 = vmatpush1.msra.mxu0 0.0
    %622 = vmatprep.subr.mxu0 0.0
    %623 = vmatpush1.msra.mxu0 0.0
    %624 = vmatprep.subr.mxu0 0.0
    %625 = vmatpush1.msra.mxu0 0.0
    %626 = vmatprep.subr.mxu0 0.0
    %627 = vmatpush1.msra.mxu0 0.0
    %628 = vmatprep.subr.mxu0 0.0
    %629 = vmatpush1.msra.mxu0 0.0
    %630 = vmatprep.subr.mxu0 0.0
    %631 = vmatpush1.msra.mxu0 0.0
    %632 = vmatprep.subr.mxu0 0.0
    %633 = vmatpush1.msra.mxu0 0.0
    %634 = vmatprep.subr.mxu0 0.0
    %635 = vmatpush1.msra.mxu0 0.0
    %636 = vmatprep.subr.mxu0 0.0
    %637 = vmatpush1.msra.mxu0 0.0
    %638 = vmatprep.subr.mxu0 0.0
    %639 = vmatpush1.msra.mxu0 0.0
    %640 = vmatprep.subr.mxu0 0.0
    %641 = vmatpush1.msra.mxu0 0.0
    %642 = vmatprep.subr.mxu0 0.0
    %643 = vmatpush1.msra.mxu0 0.0
    %644 = vmatprep.subr.mxu0 0.0
    %645 = vmatpush1.msra.mxu0 0.0
    %646 = vmatprep.subr.mxu0 0.0
    %647 = vmatpush1.msra.mxu0 0.0
    %648 = vmatprep.subr.mxu0 0.0
    %649 = vmatpush1.msra.mxu0 0.0
    %650 = vmatprep.subr.mxu0 0.0
    %651 = vmatpush1.msra.mxu0 0.0
    %652 = vmatprep.subr.mxu0 0.0
    %653 = vmatpush1.msra.mxu0 0.0
    %654 = vmatprep.subr.mxu0 0.0
    %655 = vmatpush1.msra.mxu0 0.0
    %656 = vmatprep.subr.mxu0 0.0
    %657 = vmatpush1.msra.mxu0 0.0
    %658 = vmatprep.subr.mxu0 0.0
    %659 = vmatpush1.msra.mxu0 0.0
    %660 = vmatprep.subr.mxu0 0.0
    %661 = vmatpush1.msra.mxu0 0.0
    %662 = vmatprep.mubr.f32.mxu0 0.0
    %663 = vmatmul.mubr.f32.gmra.mrb[0].mxu0 %v596
    %v664 = vpop.f32.mrb[0].mxu0
    %v665 = vadd.f32 0.0, %v664
    %v666 = vpop.f32.mrb[0].mxu0
    %667 = vdwg.mxu0
    %v669 = vsel %vm49, %v595, 0
    %671 = vmatprep.subr.mxu0 0.0
    %672 = vmatpush1.msra.mxu0 %v35
    %673 = vmatprep.subr.mxu0 0.0
    %674 = vmatpush1.msra.mxu0 %v36
    %675 = vmatprep.subr.mxu0 0.0
    %676 = vmatpush1.msra.mxu0 %v37
    %677 = vmatprep.subr.mxu0 0.0
    %678 = vmatpush1.msra.mxu0 %v38
    %679 = vmatprep.subr.mxu0 0.0
    %680 = vmatpush1.msra.mxu0 0.0
    %681 = vmatprep.subr.mxu0 0.0
    %682 = vmatpush1.msra.mxu0 0.0
    %683 = vmatprep.subr.mxu0 0.0
    %684 = vmatpush1.msra.mxu0 0.0
    %685 = vmatprep.subr.mxu0 0.0
    %686 = vmatpush1.msra.mxu0 0.0
    %687 = vmatprep.subr.mxu0 0.0
    %688 = vmatpush1.msra.mxu0 0.0
    %689 = vmatprep.subr.mxu0 0.0
    %690 = vmatpush1.msra.mxu0 0.0
    %691 = vmatprep.subr.mxu0 0.0
    %692 = vmatpush1.msra.mxu0 0.0
    %693 = vmatprep.subr.mxu0 0.0
    %694 = vmatpush1.msra.mxu0 0.0
    %695 = vmatprep.subr.mxu0 0.0
    %696 = vmatpush1.msra.mxu0 0.0
    %697 = vmatprep.subr.mxu0 0.0
    %698 = vmatpush1.msra.mxu0 0.0
    %699 = vmatprep.subr.mxu0 0.0
    %700 = vmatpush1.msra.mxu0 0.0
    %701 = vmatprep.subr.mxu0 0.0
    %702 = vmatpush1.msra.mxu0 0.0
    %703 = vmatprep.subr.mxu0 0.0
    %704 = vmatpush1.msra.mxu0 0.0
    %705 = vmatprep.subr.mxu0 0.0
    %706 = vmatpush1.msra.mxu0 0.0
    %707 = vmatprep.subr.mxu0 0.0
    %708 = vmatpush1.msra.mxu0 0.0
    %709 = vmatprep.subr.mxu0 0.0
    %710 = vmatpush1.msra.mxu0 0.0
    %711 = vmatprep.subr.mxu0 0.0
    %712 = vmatpush1.msra.mxu0 0.0
    %713 = vmatprep.subr.mxu0 0.0
    %714 = vmatpush1.msra.mxu0 0.0
    %715 = vmatprep.subr.mxu0 0.0
    %716 = vmatpush1.msra.mxu0 0.0
    %717 = vmatprep.subr.mxu0 0.0
    %718 = vmatpush1.msra.mxu0 0.0
    %719 = vmatprep.subr.mxu0 0.0
    %720 = vmatpush1.msra.mxu0 0.0
    %721 = vmatprep.subr.mxu0 0.0
    %722 = vmatpush1.msra.mxu0 0.0
    %723 = vmatprep.subr.mxu0 0.0
    %724 = vmatpush1.msra.mxu0 0.0
    %725 = vmatprep.subr.mxu0 0.0
    %726 = vmatpush1.msra.mxu0 0.0
    %727 = vmatprep.subr.mxu0 0.0
    %728 = vmatpush1.msra.mxu0 0.0
    %729 = vmatprep.subr.mxu0 0.0
    %730 = vmatpush1.msra.mxu0 0.0
    %731 = vmatprep.subr.mxu0 0.0
    %732 = vmatpush1.msra.mxu0 0.0
    %733 = vmatprep.subr.mxu0 0.0
    %734 = vmatpush1.msra.mxu0 0.0
    %735 = vmatprep.mubr.f32.mxu0 0.0
    %736 = vmatmul.mubr.f32.gmra.mrb[0].mxu0 %v669
    %v737 = vpop.f32.mrb[0].mxu0
    %v738 = vadd.f32 %v665, %v737
    %v739 = vpop.f32.mrb[0].mxu0
    %740 = vdwg.mxu0
    %v741 = vadd.f32 %v738, %v43
    %v742 = vxor.u32 %v741, 2147483648
    %v743 = vmul.f32 %v742, 1.442695
    %v744 = vpow.pop %v743
    %v745 = vadd.f32 %v744, 1.0
    %v746 = vrcp.pop %v745
    %v747 = vmul.f32 1.0, %v746
    %v748 = vtanh.pop %v741
    %v749 = vmul.f32 %v747, %v580
    %751 = vrot.lane.b32.xlu0 %v748, 64
    %v752 = vpop.permute.xlu0 %751
    %v754 = vmul.f32 %v747, %v752
    %756 = vrot.lane.b32.xlu0 %v754, 32
    %v757 = vpop.permute.xlu0 %756
    %v759 = vadd.f32 %v749, %v757
    %v760 = vtanh.pop %v759
    %762 = vrot.lane.b32.xlu0 %v760, 64
    %v763 = vpop.permute.xlu0 %762
    %v765 = vmul.f32 %v747, %v763
    %767 = vrot.lane.b32.xlu0 %v765, 32
    %v768 = vpop.permute.xlu0 %767
    %s770 = scalar_lea.vmem [#allocation4], 3
    %771 = vst.msk [vmem:[%s770] sm:$0x1] %vm233, %v768
    %s772 = sld [smem:[#allocation3 + $0x4]]
    %s773 = scalar_lea.vmem %s1, %s772
    %v774 = vld [vmem:[%s773] sm:$0x1]
    %v775 = vsel %vm49, %v768, 0
    %777 = vmatprep.subr.mxu0 0.0
    %778 = vmatpush1.msra.mxu0 %v39
    %779 = vmatprep.subr.mxu0 0.0
    %780 = vmatpush1.msra.mxu0 %v40
    %781 = vmatprep.subr.mxu0 0.0
    %782 = vmatpush1.msra.mxu0 %v41
    %783 = vmatprep.subr.mxu0 0.0
    %784 = vmatpush1.msra.mxu0 %v42
    %785 = vmatprep.subr.mxu0 0.0
    %786 = vmatpush1.msra.mxu0 0.0
    %787 = vmatprep.subr.mxu0 0.0
    %788 = vmatpush1.msra.mxu0 0.0
    %789 = vmatprep.subr.mxu0 0.0
    %790 = vmatpush1.msra.mxu0 0.0
    %791 = vmatprep.subr.mxu0 0.0
    %792 = vmatpush1.msra.mxu0 0.0
    %793 = vmatprep.subr.mxu0 0.0
    %794 = vmatpush1.msra.mxu0 0.0
    %795 = vmatprep.subr.mxu0 0.0
    %796 = vmatpush1.msra.mxu0 0.0
    %797 = vmatprep.subr.mxu0 0.0
    %798 = vmatpush1.msra.mxu0 0.0
    %799 = vmatprep.subr.mxu0 0.0
    %800 = vmatpush1.msra.mxu0 0.0
    %801 = vmatprep.subr.mxu0 0.0
    %802 = vmatpush1.msra.mxu0 0.0
    %803 = vmatprep.subr.mxu0 0.0
    %804 = vmatpush1.msra.mxu0 0.0
    %805 = vmatprep.subr.mxu0 0.0
    %806 = vmatpush1.msra.mxu0 0.0
    %807 = vmatprep.subr.mxu0 0.0
    %808 = vmatpush1.msra.mxu0 0.0
    %809 = vmatprep.subr.mxu0 0.0
    %810 = vmatpush1.msra.mxu0 0.0
    %811 = vmatprep.subr.mxu0 0.0
    %812 = vmatpush1.msra.mxu0 0.0
    %813 = vmatprep.subr.mxu0 0.0
    %814 = vmatpush1.msra.mxu0 0.0
    %815 = vmatprep.subr.mxu0 0.0
    %816 = vmatpush1.msra.mxu0 0.0
    %817 = vmatprep.subr.mxu0 0.0
    %818 = vmatpush1.msra.mxu0 0.0
    %819 = vmatprep.subr.mxu0 0.0
    %820 = vmatpush1.msra.mxu0 0.0
    %821 = vmatprep.subr.mxu0 0.0
    %822 = vmatpush1.msra.mxu0 0.0
    %823 = vmatprep.subr.mxu0 0.0
    %824 = vmatpush1.msra.mxu0 0.0
    %825 = vmatprep.subr.mxu0 0.0
    %826 = vmatpush1.msra.mxu0 0.0
    %827 = vmatprep.subr.mxu0 0.0
    %828 = vmatpush1.msra.mxu0 0.0
    %829 = vmatprep.subr.mxu0 0.0
    %830 = vmatpush1.msra.mxu0 0.0
    %831 = vmatprep.subr.mxu0 0.0
    %832 = vmatpush1.msra.mxu0 0.0
    %833 = vmatprep.subr.mxu0 0.0
    %834 = vmatpush1.msra.mxu0 0.0
    %835 = vmatprep.subr.mxu0 0.0
    %836 = vmatpush1.msra.mxu0 0.0
    %837 = vmatprep.subr.mxu0 0.0
    %838 = vmatpush1.msra.mxu0 0.0
    %839 = vmatprep.subr.mxu0 0.0
    %840 = vmatpush1.msra.mxu0 0.0
    %841 = vmatprep.mubr.f32.mxu0 0.0
    %842 = vmatmul.mubr.f32.gmra.mrb[0].mxu0 %v775
    %v843 = vpop.f32.mrb[0].mxu0
    %v844 = vadd.f32 0.0, %v843
    %v845 = vpop.f32.mrb[0].mxu0
    %846 = vdwg.mxu0
    %v848 = vsel %vm49, %v774, 0
    %850 = vmatprep.subr.mxu0 0.0
    %851 = vmatpush1.msra.mxu0 %v35
    %852 = vmatprep.subr.mxu0 0.0
    %853 = vmatpush1.msra.mxu0 %v36
    %854 = vmatprep.subr.mxu0 0.0
    %855 = vmatpush1.msra.mxu0 %v37
    %856 = vmatprep.subr.mxu0 0.0
    %857 = vmatpush1.msra.mxu0 %v38
    %858 = vmatprep.subr.mxu0 0.0
    %859 = vmatpush1.msra.mxu0 0.0
    %860 = vmatprep.subr.mxu0 0.0
    %861 = vmatpush1.msra.mxu0 0.0
    %862 = vmatprep.subr.mxu0 0.0
    %863 = vmatpush1.msra.mxu0 0.0
    %864 = vmatprep.subr.mxu0 0.0
    %865 = vmatpush1.msra.mxu0 0.0
    %866 = vmatprep.subr.mxu0 0.0
    %867 = vmatpush1.msra.mxu0 0.0
    %868 = vmatprep.subr.mxu0 0.0
    %869 = vmatpush1.msra.mxu0 0.0
    %870 = vmatprep.subr.mxu0 0.0
    %871 = vmatpush1.msra.mxu0 0.0
    %872 = vmatprep.subr.mxu0 0.0
    %873 = vmatpush1.msra.mxu0 0.0
    %874 = vmatprep.subr.mxu0 0.0
    %875 = vmatpush1.msra.mxu0 0.0
    %876 = vmatprep.subr.mxu0 0.0
    %877 = vmatpush1.msra.mxu0 0.0
    %878 = vmatprep.subr.mxu0 0.0
    %879 = vmatpush1.msra.mxu0 0.0
    %880 = vmatprep.subr.mxu0 0.0
    %881 = vmatpush1.msra.mxu0 0.0
    %882 = vmatprep.subr.mxu0 0.0
    %883 = vmatpush1.msra.mxu0 0.0
    %884 = vmatprep.subr.mxu0 0.0
    %885 = vmatpush1.msra.mxu0 0.0
    %886 = vmatprep.subr.mxu0 0.0
    %887 = vmatpush1.msra.mxu0 0.0
    %888 = vmatprep.subr.mxu0 0.0
    %889 = vmatpush1.msra.mxu0 0.0
    %890 = vmatprep.subr.mxu0 0.0
    %891 = vmatpush1.msra.mxu0 0.0
    %892 = vmatprep.subr.mxu0 0.0
    %893 = vmatpush1.msra.mxu0 0.0
    %894 = vmatprep.subr.mxu0 0.0
    %895 = vmatpush1.msra.mxu0 0.0
    %896 = vmatprep.subr.mxu0 0.0
    %897 = vmatpush1.msra.mxu0 0.0
    %898 = vmatprep.subr.mxu0 0.0
    %899 = vmatpush1.msra.mxu0 0.0
    %900 = vmatprep.subr.mxu0 0.0
    %901 = vmatpush1.msra.mxu0 0.0
    %902 = vmatprep.subr.mxu0 0.0
    %903 = vmatpush1.msra.mxu0 0.0
    %904 = vmatprep.subr.mxu0 0.0
    %905 = vmatpush1.msra.mxu0 0.0
    %906 = vmatprep.subr.mxu0 0.0
    %907 = vmatpush1.msra.mxu0 0.0
    %908 = vmatprep.subr.mxu0 0.0
    %909 = vmatpush1.msra.mxu0 0.0
    %910 = vmatprep.subr.mxu0 0.0
    %911 = vmatpush1.msra.mxu0 0.0
    %912 = vmatprep.subr.mxu0 0.0
    %913 = vmatpush1.msra.mxu0 0.0
    %914 = vmatprep.mubr.f32.mxu0 0.0
    %915 = vmatmul.mubr.f32.gmra.mrb[0].mxu0 %v848
    %v916 = vpop.f32.mrb[0].mxu0
    %v917 = vadd.f32 %v844, %v916
    %v918 = vpop.f32.mrb[0].mxu0
    %919 = vdwg.mxu0
    %v920 = vadd.f32 %v917, %v43
    %v921 = vxor.u32 %v920, 2147483648
    %v922 = vmul.f32 %v921, 1.442695
    %v923 = vpow.pop %v922
    %v924 = vadd.f32 %v923, 1.0
    %v925 = vrcp.pop %v924
    %v926 = vmul.f32 1.0, %v925
    %v927 = vtanh.pop %v920
    %v928 = vmul.f32 %v926, %v759
    %930 = vrot.lane.b32.xlu0 %v927, 64
    %v931 = vpop.permute.xlu0 %930
    %v933 = vmul.f32 %v926, %v931
    %935 = vrot.lane.b32.xlu0 %v933, 32
    %v936 = vpop.permute.xlu0 %935
    %v938 = vadd.f32 %v928, %v936
    %v939 = vtanh.pop %v938
    %941 = vrot.lane.b32.xlu0 %v939, 64
    %v942 = vpop.permute.xlu0 %941
    %v944 = vmul.f32 %v926, %v942
    %946 = vrot.lane.b32.xlu0 %v944, 32
    %v947 = vpop.permute.xlu0 %946
    %s949 = scalar_lea.vmem [#allocation4], 4
    %950 = vst.msk [vmem:[%s949] sm:$0x1] %vm233, %v947
    %s951 = sld [smem:[#allocation3 + $0x5]]
    %s952 = scalar_lea.vmem %s1, %s951
    %v953 = vld [vmem:[%s952] sm:$0x1]
    %v954 = vsel %vm49, %v947, 0
    %956 = vmatprep.subr.mxu0 0.0
    %957 = vmatpush1.msra.mxu0 %v39
    %958 = vmatprep.subr.mxu0 0.0
    %959 = vmatpush1.msra.mxu0 %v40
    %960 = vmatprep.subr.mxu0 0.0
    %961 = vmatpush1.msra.mxu0 %v41
    %962 = vmatprep.subr.mxu0 0.0
    %963 = vmatpush1.msra.mxu0 %v42
    %964 = vmatprep.subr.mxu0 0.0
    %965 = vmatpush1.msra.mxu0 0.0
    %966 = vmatprep.subr.mxu0 0.0
    %967 = vmatpush1.msra.mxu0 0.0
    %968 = vmatprep.subr.mxu0 0.0
    %969 = vmatpush1.msra.mxu0 0.0
    %970 = vmatprep.subr.mxu0 0.0
    %971 = vmatpush1.msra.mxu0 0.0
    %972 = vmatprep.subr.mxu0 0.0
    %973 = vmatpush1.msra.mxu0 0.0
    %974 = vmatprep.subr.mxu0 0.0
    %975 = vmatpush1.msra.mxu0 0.0
    %976 = vmatprep.subr.mxu0 0.0
    %977 = vmatpush1.msra.mxu0 0.0
    %978 = vmatprep.subr.mxu0 0.0
    %979 = vmatpush1.msra.mxu0 0.0
    %980 = vmatprep.subr.mxu0 0.0
    %981 = vmatpush1.msra.mxu0 0.0
    %982 = vmatprep.subr.mxu0 0.0
    %983 = vmatpush1.msra.mxu0 0.0
    %984 = vmatprep.subr.mxu0 0.0
    %985 = vmatpush1.msra.mxu0 0.0
    %986 = vmatprep.subr.mxu0 0.0
    %987 = vmatpush1.msra.mxu0 0.0
    %988 = vmatprep.subr.mxu0 0.0
    %989 = vmatpush1.msra.mxu0 0.0
    %990 = vmatprep.subr.mxu0 0.0
    %991 = vmatpush1.msra.mxu0 0.0
    %992 = vmatprep.subr.mxu0 0.0
    %993 = vmatpush1.msra.mxu0 0.0
    %994 = vmatprep.subr.mxu0 0.0
    %995 = vmatpush1.msra.mxu0 0.0
    %996 = vmatprep.subr.mxu0 0.0
    %997 = vmatpush1.msra.mxu0 0.0
    %998 = vmatprep.subr.mxu0 0.0
    %999 = vmatpush1.msra.mxu0 0.0
    %1000 = vmatprep.subr.mxu0 0.0
    %1001 = vmatpush1.msra.mxu0 0.0
    %1002 = vmatprep.subr.mxu0 0.0
    %1003 = vmatpush1.msra.mxu0 0.0
    %1004 = vmatprep.subr.mxu0 0.0
    %1005 = vmatpush1.msra.mxu0 0.0
    %1006 = vmatprep.subr.mxu0 0.0
    %1007 = vmatpush1.msra.mxu0 0.0
    %1008 = vmatprep.subr.mxu0 0.0
    %1009 = vmatpush1.msra.mxu0 0.0
    %1010 = vmatprep.subr.mxu0 0.0
    %1011 = vmatpush1.msra.mxu0 0.0
    %1012 = vmatprep.subr.mxu0 0.0
    %1013 = vmatpush1.msra.mxu0 0.0
    %1014 = vmatprep.subr.mxu0 0.0
    %1015 = vmatpush1.msra.mxu0 0.0
    %1016 = vmatprep.subr.mxu0 0.0
    %1017 = vmatpush1.msra.mxu0 0.0
    %1018 = vmatprep.subr.mxu0 0.0
    %1019 = vmatpush1.msra.mxu0 0.0
    %1020 = vmatprep.mubr.f32.mxu0 0.0
    %1021 = vmatmul.mubr.f32.gmra.mrb[0].mxu0 %v954
    %v1022 = vpop.f32.mrb[0].mxu0
    %v1023 = vadd.f32 0.0, %v1022
    %v1024 = vpop.f32.mrb[0].mxu0
    %1025 = vdwg.mxu0
    %v1027 = vsel %vm49, %v953, 0
    %1029 = vmatprep.subr.mxu0 0.0
    %1030 = vmatpush1.msra.mxu0 %v35
    %1031 = vmatprep.subr.mxu0 0.0
    %1032 = vmatpush1.msra.mxu0 %v36
    %1033 = vmatprep.subr.mxu0 0.0
    %1034 = vmatpush1.msra.mxu0 %v37
    %1035 = vmatprep.subr.mxu0 0.0
    %1036 = vmatpush1.msra.mxu0 %v38
    %1037 = vmatprep.subr.mxu0 0.0
    %1038 = vmatpush1.msra.mxu0 0.0
    %1039 = vmatprep.subr.mxu0 0.0
    %1040 = vmatpush1.msra.mxu0 0.0
    %1041 = vmatprep.subr.mxu0 0.0
    %1042 = vmatpush1.msra.mxu0 0.0
    %1043 = vmatprep.subr.mxu0 0.0
    %1044 = vmatpush1.msra.mxu0 0.0
    %1045 = vmatprep.subr.mxu0 0.0
    %1046 = vmatpush1.msra.mxu0 0.0
    %1047 = vmatprep.subr.mxu0 0.0
    %1048 = vmatpush1.msra.mxu0 0.0
    %1049 = vmatprep.subr.mxu0 0.0
    %1050 = vmatpush1.msra.mxu0 0.0
    %1051 = vmatprep.subr.mxu0 0.0
    %1052 = vmatpush1.msra.mxu0 0.0
    %1053 = vmatprep.subr.mxu0 0.0
    %1054 = vmatpush1.msra.mxu0 0.0
    %1055 = vmatprep.subr.mxu0 0.0
    %1056 = vmatpush1.msra.mxu0 0.0
    %1057 = vmatprep.subr.mxu0 0.0
    %1058 = vmatpush1.msra.mxu0 0.0
    %1059 = vmatprep.subr.mxu0 0.0
    %1060 = vmatpush1.msra.mxu0 0.0
    %1061 = vmatprep.subr.mxu0 0.0
    %1062 = vmatpush1.msra.mxu0 0.0
    %1063 = vmatprep.subr.mxu0 0.0
    %1064 = vmatpush1.msra.mxu0 0.0
    %1065 = vmatprep.subr.mxu0 0.0
    %1066 = vmatpush1.msra.mxu0 0.0
    %1067 = vmatprep.subr.mxu0 0.0
    %1068 = vmatpush1.msra.mxu0 0.0
    %1069 = vmatprep.subr.mxu0 0.0
    %1070 = vmatpush1.msra.mxu0 0.0
    %1071 = vmatprep.subr.mxu0 0.0
    %1072 = vmatpush1.msra.mxu0 0.0
    %1073 = vmatprep.subr.mxu0 0.0
    %1074 = vmatpush1.msra.mxu0 0.0
    %1075 = vmatprep.subr.mxu0 0.0
    %1076 = vmatpush1.msra.mxu0 0.0
    %1077 = vmatprep.subr.mxu0 0.0
    %1078 = vmatpush1.msra.mxu0 0.0
    %1079 = vmatprep.subr.mxu0 0.0
    %1080 = vmatpush1.msra.mxu0 0.0
    %1081 = vmatprep.subr.mxu0 0.0
    %1082 = vmatpush1.msra.mxu0 0.0
    %1083 = vmatprep.subr.mxu0 0.0
    %1084 = vmatpush1.msra.mxu0 0.0
    %1085 = vmatprep.subr.mxu0 0.0
    %1086 = vmatpush1.msra.mxu0 0.0
    %1087 = vmatprep.subr.mxu0 0.0
    %1088 = vmatpush1.msra.mxu0 0.0
    %1089 = vmatprep.subr.mxu0 0.0
    %1090 = vmatpush1.msra.mxu0 0.0
    %1091 = vmatprep.subr.mxu0 0.0
    %1092 = vmatpush1.msra.mxu0 0.0
    %1093 = vmatprep.mubr.f32.mxu0 0.0
    %1094 = vmatmul.mubr.f32.gmra.mrb[0].mxu0 %v1027
    %v1095 = vpop.f32.mrb[0].mxu0
    %v1096 = vadd.f32 %v1023, %v1095
    %v1097 = vpop.f32.mrb[0].mxu0
    %1098 = vdwg.mxu0
    %v1099 = vadd.f32 %v1096, %v43
    %v1100 = vxor.u32 %v1099, 2147483648
    %v1101 = vmul.f32 %v1100, 1.442695
    %v1102 = vpow.pop %v1101
    %v1103 = vadd.f32 %v1102, 1.0
    %v1104 = vrcp.pop %v1103
    %v1105 = vmul.f32 1.0, %v1104
    %v1106 = vtanh.pop %v1099
    %v1107 = vmul.f32 %v1105, %v938
    %1109 = vrot.lane.b32.xlu0 %v1106, 64
    %v1110 = vpop.permute.xlu0 %1109
    %v1112 = vmul.f32 %v1105, %v1110
    %1114 = vrot.lane.b32.xlu0 %v1112, 32
    %v1115 = vpop.permute.xlu0 %1114
    %v1117 = vadd.f32 %v1107, %v1115
    %v1118 = vtanh.pop %v1117
    %1120 = vrot.lane.b32.xlu0 %v1118, 64
    %v1121 = vpop.permute.xlu0 %1120
    %v1123 = vmul.f32 %v1105, %v1121
    %1125 = vrot.lane.b32.xlu0 %v1123, 32
    %v1126 = vpop.permute.xlu0 %1125
    %s1128 = scalar_lea.vmem [#allocation4], 5
    %1129 = vst.msk [vmem:[%s1128] sm:$0x1] %vm233, %v1126
    %s1130 = sld [smem:[#allocation3 + $0x6]]
    %s1131 = scalar_lea.vmem %s1, %s1130
    %v1132 = vld [vmem:[%s1131] sm:$0x1]
    %v1133 = vsel %vm49, %v1126, 0
    %1135 = vmatprep.subr.mxu0 0.0
    %1136 = vmatpush1.msra.mxu0 %v39
    %1137 = vmatprep.subr.mxu0 0.0
    %1138 = vmatpush1.msra.mxu0 %v40
    %1139 = vmatprep.subr.mxu0 0.0
    %1140 = vmatpush1.msra.mxu0 %v41
    %1141 = vmatprep.subr.mxu0 0.0
    %1142 = vmatpush1.msra.mxu0 %v42
    %1143 = vmatprep.subr.mxu0 0.0
    %1144 = vmatpush1.msra.mxu0 0.0
    %1145 = vmatprep.subr.mxu0 0.0
    %1146 = vmatpush1.msra.mxu0 0.0
    %1147 = vmatprep.subr.mxu0 0.0
    %1148 = vmatpush1.msra.mxu0 0.0
    %1149 = vmatprep.subr.mxu0 0.0
    %1150 = vmatpush1.msra.mxu0 0.0
    %1151 = vmatprep.subr.mxu0 0.0
    %1152 = vmatpush1.msra.mxu0 0.0
    %1153 = vmatprep.subr.mxu0 0.0
    %1154 = vmatpush1.msra.mxu0 0.0
    %1155 = vmatprep.subr.mxu0 0.0
    %1156 = vmatpush1.msra.mxu0 0.0
    %1157 = vmatprep.subr.mxu0 0.0
    %1158 = vmatpush1.msra.mxu0 0.0
    %1159 = vmatprep.subr.mxu0 0.0
    %1160 = vmatpush1.msra.mxu0 0.0
    %1161 = vmatprep.subr.mxu0 0.0
    %1162 = vmatpush1.msra.mxu0 0.0
    %1163 = vmatprep.subr.mxu0 0.0
    %1164 = vmatpush1.msra.mxu0 0.0
    %1165 = vmatprep.subr.mxu0 0.0
    %1166 = vmatpush1.msra.mxu0 0.0
    %1167 = vmatprep.subr.mxu0 0.0
    %1168 = vmatpush1.msra.mxu0 0.0
    %1169 = vmatprep.subr.mxu0 0.0
    %1170 = vmatpush1.msra.mxu0 0.0
    %1171 = vmatprep.subr.mxu0 0.0
    %1172 = vmatpush1.msra.mxu0 0.0
    %1173 = vmatprep.subr.mxu0 0.0
    %1174 = vmatpush1.msra.mxu0 0.0
    %1175 = vmatprep.subr.mxu0 0.0
    %1176 = vmatpush1.msra.mxu0 0.0
    %1177 = vmatprep.subr.mxu0 0.0
    %1178 = vmatpush1.msra.mxu0 0.0
    %1179 = vmatprep.subr.mxu0 0.0
    %1180 = vmatpush1.msra.mxu0 0.0
    %1181 = vmatprep.subr.mxu0 0.0
    %1182 = vmatpush1.msra.mxu0 0.0
    %1183 = vmatprep.subr.mxu0 0.0
    %1184 = vmatpush1.msra.mxu0 0.0
    %1185 = vmatprep.subr.mxu0 0.0
    %1186 = vmatpush1.msra.mxu0 0.0
    %1187 = vmatprep.subr.mxu0 0.0
    %1188 = vmatpush1.msra.mxu0 0.0
    %1189 = vmatprep.subr.mxu0 0.0
    %1190 = vmatpush1.msra.mxu0 0.0
    %1191 = vmatprep.subr.mxu0 0.0
    %1192 = vmatpush1.msra.mxu0 0.0
    %1193 = vmatprep.subr.mxu0 0.0
    %1194 = vmatpush1.msra.mxu0 0.0
    %1195 = vmatprep.subr.mxu0 0.0
    %1196 = vmatpush1.msra.mxu0 0.0
    %1197 = vmatprep.subr.mxu0 0.0
    %1198 = vmatpush1.msra.mxu0 0.0
    %1199 = vmatprep.mubr.f32.mxu0 0.0
    %1200 = vmatmul.mubr.f32.gmra.mrb[0].mxu0 %v1133
    %v1201 = vpop.f32.mrb[0].mxu0
    %v1202 = vadd.f32 0.0, %v1201
    %v1203 = vpop.f32.mrb[0].mxu0
    %1204 = vdwg.mxu0
    %v1206 = vsel %vm49, %v1132, 0
    %1208 = vmatprep.subr.mxu0 0.0
    %1209 = vmatpush1.msra.mxu0 %v35
    %1210 = vmatprep.subr.mxu0 0.0
    %1211 = vmatpush1.msra.mxu0 %v36
    %1212 = vmatprep.subr.mxu0 0.0
    %1213 = vmatpush1.msra.mxu0 %v37
    %1214 = vmatprep.subr.mxu0 0.0
    %1215 = vmatpush1.msra.mxu0 %v38
    %1216 = vmatprep.subr.mxu0 0.0
    %1217 = vmatpush1.msra.mxu0 0.0
    %1218 = vmatprep.subr.mxu0 0.0
    %1219 = vmatpush1.msra.mxu0 0.0
    %1220 = vmatprep.subr.mxu0 0.0
    %1221 = vmatpush1.msra.mxu0 0.0
    %1222 = vmatprep.subr.mxu0 0.0
    %1223 = vmatpush1.msra.mxu0 0.0
    %1224 = vmatprep.subr.mxu0 0.0
    %1225 = vmatpush1.msra.mxu0 0.0
    %1226 = vmatprep.subr.mxu0 0.0
    %1227 = vmatpush1.msra.mxu0 0.0
    %1228 = vmatprep.subr.mxu0 0.0
    %1229 = vmatpush1.msra.mxu0 0.0
    %1230 = vmatprep.subr.mxu0 0.0
    %1231 = vmatpush1.msra.mxu0 0.0
    %1232 = vmatprep.subr.mxu0 0.0
    %1233 = vmatpush1.msra.mxu0 0.0
    %1234 = vmatprep.subr.mxu0 0.0
    %1235 = vmatpush1.msra.mxu0 0.0
    %1236 = vmatprep.subr.mxu0 0.0
    %1237 = vmatpush1.msra.mxu0 0.0
    %1238 = vmatprep.subr.mxu0 0.0
    %1239 = vmatpush1.msra.mxu0 0.0
    %1240 = vmatprep.subr.mxu0 0.0
    %1241 = vmatpush1.msra.mxu0 0.0
    %1242 = vmatprep.subr.mxu0 0.0
    %1243 = vmatpush1.msra.mxu0 0.0
    %1244 = vmatprep.subr.mxu0 0.0
    %1245 = vmatpush1.msra.mxu0 0.0
    %1246 = vmatprep.subr.mxu0 0.0
    %1247 = vmatpush1.msra.mxu0 0.0
    %1248 = vmatprep.subr.mxu0 0.0
    %1249 = vmatpush1.msra.mxu0 0.0
    %1250 = vmatprep.subr.mxu0 0.0
    %1251 = vmatpush1.msra.mxu0 0.0
    %1252 = vmatprep.subr.mxu0 0.0
    %1253 = vmatpush1.msra.mxu0 0.0
    %1254 = vmatprep.subr.mxu0 0.0
    %1255 = vmatpush1.msra.mxu0 0.0
    %1256 = vmatprep.subr.mxu0 0.0
    %1257 = vmatpush1.msra.mxu0 0.0
    %1258 = vmatprep.subr.mxu0 0.0
    %1259 = vmatpush1.msra.mxu0 0.0
    %1260 = vmatprep.subr.mxu0 0.0
    %1261 = vmatpush1.msra.mxu0 0.0
    %1262 = vmatprep.subr.mxu0 0.0
    %1263 = vmatpush1.msra.mxu0 0.0
    %1264 = vmatprep.subr.mxu0 0.0
    %1265 = vmatpush1.msra.mxu0 0.0
    %1266 = vmatprep.subr.mxu0 0.0
    %1267 = vmatpush1.msra.mxu0 0.0
    %1268 = vmatprep.subr.mxu0 0.0
    %1269 = vmatpush1.msra.mxu0 0.0
    %1270 = vmatprep.subr.mxu0 0.0
    %1271 = vmatpush1.msra.mxu0 0.0
    %1272 = vmatprep.mubr.f32.mxu0 0.0
    %1273 = vmatmul.mubr.f32.gmra.mrb[0].mxu0 %v1206
    %v1274 = vpop.f32.mrb[0].mxu0
    %v1275 = vadd.f32 %v1202, %v1274
    %v1276 = vpop.f32.mrb[0].mxu0
    %1277 = vdwg.mxu0
    %v1278 = vadd.f32 %v1275, %v43
    %v1279 = vxor.u32 %v1278, 2147483648
    %v1280 = vmul.f32 %v1279, 1.442695
    %v1281 = vpow.pop %v1280
    %v1282 = vadd.f32 %v1281, 1.0
    %v1283 = vrcp.pop %v1282
    %v1284 = vmul.f32 1.0, %v1283
    %v1285 = vtanh.pop %v1278
    %v1286 = vmul.f32 %v1284, %v1117
    %1288 = vrot.lane.b32.xlu0 %v1285, 64
    %v1289 = vpop.permute.xlu0 %1288
    %v1291 = vmul.f32 %v1284, %v1289
    %1293 = vrot.lane.b32.xlu0 %v1291, 32
    %v1294 = vpop.permute.xlu0 %1293
    %v1296 = vadd.f32 %v1286, %v1294
    %v1297 = vtanh.pop %v1296
    %1299 = vrot.lane.b32.xlu0 %v1297, 64
    %v1300 = vpop.permute.xlu0 %1299
    %v1302 = vmul.f32 %v1284, %v1300
    %1304 = vrot.lane.b32.xlu0 %v1302, 32
    %v1305 = vpop.permute.xlu0 %1304
    %s1307 = scalar_lea.vmem [#allocation4], 6
    %1308 = vst.msk [vmem:[%s1307] sm:$0x1] %vm233, %v1305
    %s1309 = sld [smem:[#allocation3 + $0x7]]
    %s1310 = scalar_lea.vmem %s1, %s1309
    %v1311 = vld [vmem:[%s1310] sm:$0x1]
    %v1312 = vsel %vm49, %v1305, 0
    %1314 = vmatprep.subr.mxu0 0.0
    %1315 = vmatpush1.msra.mxu0 %v39
    %1316 = vmatprep.subr.mxu0 0.0
    %1317 = vmatpush1.msra.mxu0 %v40
    %1318 = vmatprep.subr.mxu0 0.0
    %1319 = vmatpush1.msra.mxu0 %v41
    %1320 = vmatprep.subr.mxu0 0.0
    %1321 = vmatpush1.msra.mxu0 %v42
    %1322 = vmatprep.subr.mxu0 0.0
    %1323 = vmatpush1.msra.mxu0 0.0
    %1324 = vmatprep.subr.mxu0 0.0
    %1325 = vmatpush1.msra.mxu0 0.0
    %1326 = vmatprep.subr.mxu0 0.0
    %1327 = vmatpush1.msra.mxu0 0.0
    %1328 = vmatprep.subr.mxu0 0.0
    %1329 = vmatpush1.msra.mxu0 0.0
    %1330 = vmatprep.subr.mxu0 0.0
    %1331 = vmatpush1.msra.mxu0 0.0
    %1332 = vmatprep.subr.mxu0 0.0
    %1333 = vmatpush1.msra.mxu0 0.0
    %1334 = vmatprep.subr.mxu0 0.0
    %1335 = vmatpush1.msra.mxu0 0.0
    %1336 = vmatprep.subr.mxu0 0.0
    %1337 = vmatpush1.msra.mxu0 0.0
    %1338 = vmatprep.subr.mxu0 0.0
    %1339 = vmatpush1.msra.mxu0 0.0
    %1340 = vmatprep.subr.mxu0 0.0
    %1341 = vmatpush1.msra.mxu0 0.0
    %1342 = vmatprep.subr.mxu0 0.0
    %1343 = vmatpush1.msra.mxu0 0.0
    %1344 = vmatprep.subr.mxu0 0.0
    %1345 = vmatpush1.msra.mxu0 0.0
    %1346 = vmatprep.subr.mxu0 0.0
    %1347 = vmatpush1.msra.mxu0 0.0
    %1348 = vmatprep.subr.mxu0 0.0
    %1349 = vmatpush1.msra.mxu0 0.0
    %1350 = vmatprep.subr.mxu0 0.0
    %1351 = vmatpush1.msra.mxu0 0.0
    %1352 = vmatprep.subr.mxu0 0.0
    %1353 = vmatpush1.msra.mxu0 0.0
    %1354 = vmatprep.subr.mxu0 0.0
    %1355 = vmatpush1.msra.mxu0 0.0
    %1356 = vmatprep.subr.mxu0 0.0
    %1357 = vmatpush1.msra.mxu0 0.0
    %1358 = vmatprep.subr.mxu0 0.0
    %1359 = vmatpush1.msra.mxu0 0.0
    %1360 = vmatprep.subr.mxu0 0.0
    %1361 = vmatpush1.msra.mxu0 0.0
    %1362 = vmatprep.subr.mxu0 0.0
    %1363 = vmatpush1.msra.mxu0 0.0
    %1364 = vmatprep.subr.mxu0 0.0
    %1365 = vmatpush1.msra.mxu0 0.0
    %1366 = vmatprep.subr.mxu0 0.0
    %1367 = vmatpush1.msra.mxu0 0.0
    %1368 = vmatprep.subr.mxu0 0.0
    %1369 = vmatpush1.msra.mxu0 0.0
    %1370 = vmatprep.subr.mxu0 0.0
    %1371 = vmatpush1.msra.mxu0 0.0
    %1372 = vmatprep.subr.mxu0 0.0
    %1373 = vmatpush1.msra.mxu0 0.0
    %1374 = vmatprep.subr.mxu0 0.0
    %1375 = vmatpush1.msra.mxu0 0.0
    %1376 = vmatprep.subr.mxu0 0.0
    %1377 = vmatpush1.msra.mxu0 0.0
    %1378 = vmatprep.mubr.f32.mxu0 0.0
    %1379 = vmatmul.mubr.f32.gmra.mrb[0].mxu0 %v1312
    %v1380 = vpop.f32.mrb[0].mxu0
    %v1381 = vadd.f32 0.0, %v1380
    %v1382 = vpop.f32.mrb[0].mxu0
    %1383 = vdwg.mxu0
    %v1385 = vsel %vm49, %v1311, 0
    %1387 = vmatprep.subr.mxu0 0.0
    %1388 = vmatpush1.msra.mxu0 %v35
    %1389 = vmatprep.subr.mxu0 0.0
    %1390 = vmatpush1.msra.mxu0 %v36
    %1391 = vmatprep.subr.mxu0 0.0
    %1392 = vmatpush1.msra.mxu0 %v37
    %1393 = vmatprep.subr.mxu0 0.0
    %1394 = vmatpush1.msra.mxu0 %v38
    %1395 = vmatprep.subr.mxu0 0.0
    %1396 = vmatpush1.msra.mxu0 0.0
    %1397 = vmatprep.subr.mxu0 0.0
    %1398 = vmatpush1.msra.mxu0 0.0
    %1399 = vmatprep.subr.mxu0 0.0
    %1400 = vmatpush1.msra.mxu0 0.0
    %1401 = vmatprep.subr.mxu0 0.0
    %1402 = vmatpush1.msra.mxu0 0.0
    %1403 = vmatprep.subr.mxu0 0.0
    %1404 = vmatpush1.msra.mxu0 0.0
    %1405 = vmatprep.subr.mxu0 0.0
    %1406 = vmatpush1.msra.mxu0 0.0
    %1407 = vmatprep.subr.mxu0 0.0
    %1408 = vmatpush1.msra.mxu0 0.0
    %1409 = vmatprep.subr.mxu0 0.0
    %1410 = vmatpush1.msra.mxu0 0.0
    %1411 = vmatprep.subr.mxu0 0.0
    %1412 = vmatpush1.msra.mxu0 0.0
    %1413 = vmatprep.subr.mxu0 0.0
    %1414 = vmatpush1.msra.mxu0 0.0
    %1415 = vmatprep.subr.mxu0 0.0
    %1416 = vmatpush1.msra.mxu0 0.0
    %1417 = vmatprep.subr.mxu0 0.0
    %1418 = vmatpush1.msra.mxu0 0.0
    %1419 = vmatprep.subr.mxu0 0.0
    %1420 = vmatpush1.msra.mxu0 0.0
    %1421 = vmatprep.subr.mxu0 0.0
    %1422 = vmatpush1.msra.mxu0 0.0
    %1423 = vmatprep.subr.mxu0 0.0
    %1424 = vmatpush1.msra.mxu0 0.0
    %1425 = vmatprep.subr.mxu0 0.0
    %1426 = vmatpush1.msra.mxu0 0.0
    %1427 = vmatprep.subr.mxu0 0.0
    %1428 = vmatpush1.msra.mxu0 0.0
    %1429 = vmatprep.subr.mxu0 0.0
    %1430 = vmatpush1.msra.mxu0 0.0
    %1431 = vmatprep.subr.mxu0 0.0
    %1432 = vmatpush1.msra.mxu0 0.0
    %1433 = vmatprep.subr.mxu0 0.0
    %1434 = vmatpush1.msra.mxu0 0.0
    %1435 = vmatprep.subr.mxu0 0.0
    %1436 = vmatpush1.msra.mxu0 0.0
    %1437 = vmatprep.subr.mxu0 0.0
    %1438 = vmatpush1.msra.mxu0 0.0
    %1439 = vmatprep.subr.mxu0 0.0
    %1440 = vmatpush1.msra.mxu0 0.0
    %1441 = vmatprep.subr.mxu0 0.0
    %1442 = vmatpush1.msra.mxu0 0.0
    %1443 = vmatprep.subr.mxu0 0.0
    %1444 = vmatpush1.msra.mxu0 0.0
    %1445 = vmatprep.subr.mxu0 0.0
    %1446 = vmatpush1.msra.mxu0 0.0
    %1447 = vmatprep.subr.mxu0 0.0
    %1448 = vmatpush1.msra.mxu0 0.0
    %1449 = vmatprep.subr.mxu0 0.0
    %1450 = vmatpush1.msra.mxu0 0.0
    %1451 = vmatprep.mubr.f32.mxu0 0.0
    %1452 = vmatmul.mubr.f32.gmra.mrb[0].mxu0 %v1385
    %v1453 = vpop.f32.mrb[0].mxu0
    %v1454 = vadd.f32 %v1381, %v1453
    %v1455 = vpop.f32.mrb[0].mxu0
    %1456 = vdwg.mxu0
    %v1457 = vadd.f32 %v1454, %v43
    %v1458 = vxor.u32 %v1457, 2147483648
    %v1459 = vmul.f32 %v1458, 1.442695
    %v1460 = vpow.pop %v1459
    %v1461 = vadd.f32 %v1460, 1.0
    %v1462 = vrcp.pop %v1461
    %v1463 = vmul.f32 1.0, %v1462
    %v1464 = vtanh.pop %v1457
    %v1465 = vmul.f32 %v1463, %v1296
    %1467 = vrot.lane.b32.xlu0 %v1464, 64
    %v1468 = vpop.permute.xlu0 %1467
    %v1470 = vmul.f32 %v1463, %v1468
    %1472 = vrot.lane.b32.xlu0 %v1470, 32
    %v1473 = vpop.permute.xlu0 %1472
    %v1475 = vadd.f32 %v1465, %v1473
    %v1476 = vtanh.pop %v1475
    %1478 = vrot.lane.b32.xlu0 %v1476, 64
    %v1479 = vpop.permute.xlu0 %1478
    %v1481 = vmul.f32 %v1463, %v1479
    %1483 = vrot.lane.b32.xlu0 %v1481, 32
    %v1484 = vpop.permute.xlu0 %1483
    %s1486 = scalar_lea.vmem [#allocation4], 7
    %1487 = vst.msk [vmem:[%s1486] sm:$0x1] %vm233, %v1484
    %1488 = vst.msk [vmem:[#allocation6] sm:$0x1] %vm233, %v1484
    %1490 = vrot.lane.b32.xlu0 %v1475, 96
    %v1491 = vpop.permute.xlu0 %1490
    %1493 = vst.msk [vmem:[#allocation8] sm:$0x1] %vm233, %v1491
    // Predicated region
    $region26: #{tpu_custom_call.1} parent=1 // pred_check
      _
    $region27: #{tpu_custom_call.1} parent=1 // pred_check_branch
      %1495 = sbr.rel (0) target = $region29
    $region28: #{tpu_custom_call.1} parent=1 // pred_region
      %s1497 = ssub.s32 128, 128
      %1498 = vsyncadd [#allocation5], %s1497
      %s1499 = sshll.u32 [#allocation4], 4
      %s1500 = int_to_ptr.vmem [resolvable:$true] %s1499
      %1505 = dma.vmem_to_hbm [thread:$0]  %s1500, 128, %s7, [#allocation5], 16, 16, 1
    $region29: #{tpu_custom_call.1} parent=1 // pred_fallthru
      _
    // Predicated region
    $region30: #{tpu_custom_call.1} parent=1 // pred_check
      _
    $region31: #{tpu_custom_call.1} parent=1 // pred_check_branch
      %1507 = sbr.rel (0) target = $region33
    $region32: #{tpu_custom_call.1} parent=1 // pred_region
      %s1509 = ssub.s32 16, 16
      %1510 = vsyncadd [#allocation7], %s1509
      %s1512 = sshll.u32 [#allocation6], 4
      %s1513 = int_to_ptr.vmem [resolvable:$true] %s1512
      %1515 = dma.vmem_to_hbm [thread:$0]  %s1513, 16, %s8, [#allocation7]
    $region33: #{tpu_custom_call.1} parent=1 // pred_fallthru
      _
    // Predicated region
    $region34: #{tpu_custom_call.1} parent=1 // pred_check
      _
    $region35: #{tpu_custom_call.1} parent=1 // pred_check_branch
      %1517 = sbr.rel (0) target = $region37
    $region36: #{tpu_custom_call.1} parent=1 // pred_region
      %s1519 = ssub.s32 16, 16
      %1520 = vsyncadd [#allocation7], %s1519
      %s1522 = sshll.u32 [#allocation8], 4
      %s1523 = int_to_ptr.vmem [resolvable:$true] %s1522
      %1525 = dma.vmem_to_hbm [thread:$0]  %s1523, 16, %s9, [#allocation7]
    $region37: #{tpu_custom_call.1} parent=1 // pred_fallthru
      _
    // Predicated region
    $region38: #{tpu_custom_call.1} parent=1 // pred_check
      _
    $region39: #{tpu_custom_call.1} parent=1 // pred_check_branch
      %1527 = sbr.rel (0) target = $region41
    $region40: #{tpu_custom_call.1} parent=1 // pred_region
      %1528 = dma.done [#allocation5], 128
    $region41: #{tpu_custom_call.1} parent=1 // pred_fallthru
      _
    // Predicated region
    $region42: #{tpu_custom_call.1} parent=1 // pred_check
      _
    $region43: #{tpu_custom_call.1} parent=1 // pred_check_branch
      %1530 = sbr.rel (0) target = $region45
    $region44: #{tpu_custom_call.1} parent=1 // pred_region
      %1531 = dma.done [#allocation7], 16
    $region45: #{tpu_custom_call.1} parent=1 // pred_fallthru
      _
    // Predicated region
    $region46: #{tpu_custom_call.1} parent=1 // pred_check
      _
    $region47: #{tpu_custom_call.1} parent=1 // pred_check_branch
      %1533 = sbr.rel (0) target = $region49
    $region48: #{tpu_custom_call.1} parent=1 // pred_region
      %1534 = dma.done [#allocation7], 16
    $region49: #{tpu_custom_call.1} parent=1 // pred_fallthru
      _
    %1535 = vsyncpa [#allocation5], 1
    %1536 = vsyncpa [#allocation7], 1

</llo_original>
